<compile_context>
chip_gen: v7x
topology: tpu7x:2x2x1
jax: 0.10.0
libtpu: 0.0.40
codegen_flags: <defaults>
</compile_context>

<pallas_src>
import functools

import jax
import jax.numpy as jnp
from jax.experimental import pallas as pl
from jax.experimental.pallas import tpu as pltpu

KERNEL_SIZE = 3
LN_EPS = 1e-5


def _make_fused_kernel(B: int, T: int, C: int, num_layers: int):
    """All num_layers DepthwiseSeparableConv layers + residuals, fused."""
    buf_lengths = [(KERNEL_SIZE - 1) * 2 ** i for i in range(num_layers)]
    buf_starts = [0]
    for i in range(num_layers - 1):
        buf_starts.append(buf_starts[-1] + buf_lengths[i])

    d_max = 2 ** (num_layers - 1)
    off_x = (KERNEL_SIZE - 1) * d_max          # fixed, 8-aligned x offset in scratch
    inv_c = 1.0 / float(C)

    def layer_norm(v, g, b):
        mu = jnp.sum(v, axis=-1, keepdims=True) * inv_c
        vc = v - mu
        var = jnp.sum(vc * vc, axis=-1, keepdims=True) * inv_c
        # rsqrt runs on the EUP slot (free next to VPU); ~1ulp vs 1/sqrt.
        return vc * jax.lax.rsqrt(var + LN_EPS) * g + b

    def kernel(x_ref, ctx_ref, vec_ref, wpw_ref, xo_ref, ctxo_ref, scr):
        # Stage x ONCE at a fixed, sublane-aligned scratch offset; it stays
        # there (updated in place by the residual) for the whole layer stack.
        for b in range(B):
            scr[b, off_x:off_x + T, :] = x_ref[b].astype(jnp.float32)

        for i in range(num_layers):                       # static unroll
            d = 2 ** i
            blen = buf_lengths[i]
            s = buf_starts[i]

            v = vec_ref[i].astype(jnp.float32)            # [16, C] (rows 9..15 pad)
            w0, w1, w2 = v[0:1, :], v[1:2, :], v[2:3, :]
            bdw, g1, be1 = v[3:4, :], v[4:5, :], v[5:6, :]
            bpw, g2, be2 = v[6:7, :], v[7:8, :], v[8:9, :]

            ys = []
            for b in range(B):
                # Prepend this layer's context right below the resident x.
                scr[b, off_x - blen:off_x, :] = (
                    ctx_ref[b, s:s + blen, :].astype(jnp.float32))
                # Updated context = last blen (pre-residual) time steps.
                ctxo_ref[b, s:s + blen, :] = (
                    scr[b, off_x + T - blen:off_x + T, :].astype(ctxo_ref.dtype))
                # Depthwise dilated causal conv: 3 shifted reads (valid pad).
                t0 = scr[b, off_x - 2 * d:off_x - 2 * d + T, :]
                t1 = scr[b, off_x - d:off_x - d + T, :]
                t2 = scr[b, off_x:off_x + T, :]
                ys.append(t0 * w0 + t1 * w1 + t2 * w2 + bdw)

            # Fold batch into the matmul rows: one [B*T, C] @ [C, C] per layer.
            y = jnp.concatenate(ys, axis=0)               # [B*T, C]
            y = jnp.maximum(layer_norm(y, g1, be1), 0.0)
            z = jnp.dot(y, wpw_ref[i].astype(jnp.float32),
                        preferred_element_type=jnp.float32) + bpw
            z = jnp.maximum(layer_norm(z, g2, be2), 0.0)

            # Residual connection, applied in place to the resident x.
            for b in range(B):
                scr[b, off_x:off_x + T, :] = (
                    scr[b, off_x:off_x + T, :] + z[b * T:(b + 1) * T, :])

        for b in range(B):
            xo_ref[b] = scr[b, off_x:off_x + T, :].astype(xo_ref.dtype)

    return kernel


def init_params(key, channels, num_layers):
    """Deterministic synthetic parameters (shapes follow the PyTorch module)."""
    params = []
    for i in range(num_layers):
        keys = jax.random.split(jax.random.fold_in(key, i), 4)
        w_dw = 0.3 * jax.random.normal(keys[0], (KERNEL_SIZE, channels), jnp.float32)
        b_dw = 0.1 * jax.random.normal(keys[1], (1, channels), jnp.float32)
        g1 = jnp.ones((1, channels), jnp.float32)     # fresh LayerNorm weight
        be1 = jnp.zeros((1, channels), jnp.float32)   # fresh LayerNorm bias
        # PyTorch Conv1d(C, C, 1) weight is [C_out, C_in, 1]; we store its
        # transpose [C_in, C_out] so the kernel can do y @ Wt.
        w_pw = 0.2 * jax.random.normal(keys[2], (channels, channels), jnp.float32)
        b_pw = 0.1 * jax.random.normal(keys[3], (1, channels), jnp.float32)
        g2 = jnp.ones((1, channels), jnp.float32)
        be2 = jnp.zeros((1, channels), jnp.float32)
        params.append((w_dw, b_dw, g1, be1, w_pw, b_pw, g2, be2))
    return params


def init_ctx_buf(batch_size, channels, num_layers):
    total = (KERNEL_SIZE - 1) * (2 ** num_layers - 1)
    return jnp.zeros((batch_size, channels, total), jnp.float32)


def dilated_causal_conv_encoder(x, ctx_buf, params, num_layers):
    """
    Args:
        x:       [B, C, T]                       input audio features
        ctx_buf: [B, C, (k-1)*(2^L - 1)]         context buffer
    Returns:
        (x_out [B, C, T], updated ctx_buf)
    """
    B, C, T = x.shape
    total = (KERNEL_SIZE - 1) * (2 ** num_layers - 1)
    d_max = 2 ** (num_layers - 1)
    assert T >= (KERNEL_SIZE - 1) * d_max, (
        "T smaller than the largest context slot is not supported")

    # [B, C, T] -> [B, T, C]; no channel padding (channels stay lane-minor at
    # their true width, so no 4x HBM inflation and no pad/slice XLA passes).
    x_btc = jnp.transpose(x, (0, 2, 1))
    ctx_btc = jnp.transpose(ctx_buf, (0, 2, 1))

    # Pack per-layer parameters:
    #   vec_pack [L, 16, C] rows: wdw0, wdw1, wdw2, bdw, g1, be1, bpw, g2, be2
    #            (padded 9 -> 16 rows for an aligned sublane tile)
    #   wpw      [L, C, C]  pointwise (1x1 conv) weights, [C_in, C_out]
    vecs, wps = [], []
    for (w_dw, b_dw, g1, be1, w_pw, b_pw, g2, be2) in params:
        v = jnp.concatenate([w_dw, b_dw, g1, be1, b_pw, g2, be2], axis=0)  # [9, C]
        vecs.append(jnp.pad(v, [(0, 16 - v.shape[0]), (0, 0)]))
        wps.append(w_pw)
    vec_pack = jnp.stack(vecs)                # [L, 16, C]
    wpw = jnp.stack(wps)                      # [L, C, C]

    kernel = _make_fused_kernel(B, T, C, num_layers)

    x_out, ctx_out = pl.pallas_call(
        kernel,
        out_shape=(jax.ShapeDtypeStruct((B, T, C), x.dtype),
                   jax.ShapeDtypeStruct((B, total, C), ctx_buf.dtype)),
        grid=(1,),     # single step: batch is folded into matmul rows; weight
                       # blocks are DMA'd exactly once (no re-fetch).
        in_specs=[
            pl.BlockSpec((B, T, C), lambda g: (0, 0, 0)),              # x
            pl.BlockSpec((B, total, C), lambda g: (0, 0, 0)),          # ctx_buf
            pl.BlockSpec((num_layers, 16, C), lambda g: (0, 0, 0)),    # packed vecs
            pl.BlockSpec((num_layers, C, C), lambda g: (0, 0, 0)),     # pointwise W
        ],
        out_specs=(
            pl.BlockSpec((B, T, C), lambda g: (0, 0, 0)),              # x out
            pl.BlockSpec((B, total, C), lambda g: (0, 0, 0)),          # ctx out
        ),
        scratch_shapes=[
            pltpu.VMEM((B, (KERNEL_SIZE - 1) * d_max + T, C), jnp.float32)],
        compiler_params=pltpu.CompilerParams(
            dimension_semantics=("arbitrary",)),
    )(x_btc, ctx_btc, vec_pack, wpw)

    x_out = jnp.transpose(x_out, (0, 2, 1))
    ctx_out = jnp.transpose(ctx_out, (0, 2, 1))
    return x_out, ctx_out


# ----------------------------- pure-JAX reference -----------------------------
def _reference(x, ctx_buf, params, num_layers):
    buf_lengths = [(KERNEL_SIZE - 1) * 2 ** i for i in range(num_layers)]
    buf_indices = [0]
    for i in range(num_layers - 1):
        buf_indices.append(buf_indices[-1] + buf_lengths[i])
    x_btc = jnp.transpose(x, (0, 2, 1))
    ctx_btc = jnp.transpose(ctx_buf, (0, 2, 1))

    def ln(v, g, b):
        mu = jnp.mean(v, -1, keepdims=True)
        var = jnp.mean((v - mu) ** 2, -1, keepdims=True)
        return (v - mu) / jnp.sqrt(var + LN_EPS) * g + b

    for i in range(num_layers):
        d = 2 ** i
        s, blen = buf_indices[i], buf_lengths[i]
        T = x_btc.shape[1]
        dcc_in = jnp.concatenate([ctx_btc[:, s:s + blen, :], x_btc], axis=1)
        ctx_btc = ctx_btc.at[:, s:s + blen, :].set(dcc_in[:, -blen:, :])
        w_dw, b_dw, g1, be1, w_pw, b_pw, g2, be2 = params[i]
        y = (dcc_in[:, 0:T, :] * w_dw[0] + dcc_in[:, d:d + T, :] * w_dw[1]
             + dcc_in[:, 2 * d:2 * d + T, :] * w_dw[2]) + b_dw
        y = jnp.maximum(ln(y, g1, be1), 0.0)
        z = jnp.einsum("btc,cd->btd", y, w_pw) + b_pw
        z = jnp.maximum(ln(z, g2, be2), 0.0)
        x_btc = x_btc + z
    return jnp.transpose(x_btc, (0, 2, 1)), jnp.transpose(ctx_btc, (0, 2, 1))


if __name__ == "__main__":
    B, C, T, L = 2, 32, 16, 4
    key = jax.random.PRNGKey(0)
    k_x, k_x2, k_p = jax.random.split(key, 3)

    x = jax.random.normal(k_x, (B, C, T), jnp.float32)
    x2 = jax.random.normal(k_x2, (B, C, T), jnp.float32)
    ctx = init_ctx_buf(B, C, L)
    params = init_params(k_p, C, L)

    fwd = jax.jit(functools.partial(dilated_causal_conv_encoder, num_layers=L))

    # Step 1: fresh (zero) context.
    out1, ctx1 = fwd(x, ctx, params)
    # Step 2: streaming call with non-zero context (exercises ctx read path).
    out2, ctx2 = fwd(x2, ctx1, params)
    jax.block_until_ready((out1, ctx1, out2, ctx2))

    r_out1, r_ctx1 = _reference(x, ctx, params, L)
    r_out2, r_ctx2 = _reference(x2, r_ctx1, params, L)

    assert out1.shape == (B, C, T) and ctx1.shape == ctx.shape
    assert jnp.allclose(out1, r_out1, atol=1e-4, rtol=1e-4)
    assert jnp.allclose(ctx1, r_ctx1, atol=1e-5, rtol=1e-5)
    assert jnp.allclose(out2, r_out2, atol=1e-4, rtol=1e-4)
    assert jnp.allclose(ctx2, r_ctx2, atol=1e-5, rtol=1e-5)

    print("KERNEL_OK")
</pallas_src>

<mosaic_0001>
module attributes {stable_mosaic.version = 11 : i64} {
  func.func @kernel(%arg0: i32, %arg1: memref<2x16x32xf32, #tpu.memory_space<vmem>>, %arg2: memref<2x30x32xf32, #tpu.memory_space<vmem>>, %arg3: memref<4x16x32xf32, #tpu.memory_space<vmem>>, %arg4: memref<4x32x32xf32, #tpu.memory_space<vmem>>, %arg5: memref<2x16x32xf32, #tpu.memory_space<vmem>>, %arg6: memref<2x30x32xf32, #tpu.memory_space<vmem>>, %arg7: memref<2x32x32xf32, #tpu.memory_space<vmem>>) attributes {dimension_semantics = [#tpu.dimension_semantics<arbitrary>], iteration_bounds = array<i64: 1>, scalar_prefetch = 0 : i64, scratch_operands = 1 : i64, tpu.core_type = #tpu.core_type<tc>, window_params = [{pipeline_mode = #tpu.pipeline_mode<synchronous>, transform_indices = @transform_0, window_bounds = array<i64: 2, 16, 32>}, {pipeline_mode = #tpu.pipeline_mode<synchronous>, transform_indices = @transform_1, window_bounds = array<i64: 2, 30, 32>}, {pipeline_mode = #tpu.pipeline_mode<synchronous>, transform_indices = @transform_2, window_bounds = array<i64: 4, 16, 32>}, {pipeline_mode = #tpu.pipeline_mode<synchronous>, transform_indices = @transform_3, window_bounds = array<i64: 4, 32, 32>}, {pipeline_mode = #tpu.pipeline_mode<synchronous>, transform_indices = @transform_4, window_bounds = array<i64: 2, 16, 32>}, {pipeline_mode = #tpu.pipeline_mode<synchronous>, transform_indices = @transform_5, window_bounds = array<i64: 2, 30, 32>}]} {
    %c0 = arith.constant 0 : index
    %c0_0 = arith.constant 0 : index
    %c0_1 = arith.constant 0 : index
    %0 = vector.load %arg1[%c0, %c0_0, %c0_1] : memref<2x16x32xf32, #tpu.memory_space<vmem>>, vector<1x16x32xf32>
    %1 = vector.shape_cast %0 : vector<1x16x32xf32> to vector<16x32xf32>
    %c0_2 = arith.constant 0 : index
    %c16 = arith.constant 16 : index
    %c0_3 = arith.constant 0 : index
    %2 = vector.load %arg7[%c0_2, %c16, %c0_3] : memref<2x32x32xf32, #tpu.memory_space<vmem>>, vector<1x16x32xf32>
    %3 = vector.shape_cast %2 : vector<1x16x32xf32> to vector<16x32xf32>
    %4 = vector.shape_cast %1 : vector<16x32xf32> to vector<1x16x32xf32>
    tpu.vector_store %arg7[%c0_2, %c16, %c0_3], %4 {strides = array<i32>} : memref<2x32x32xf32, #tpu.memory_space<vmem>>, vector<1x16x32xf32>,
    %c1 = arith.constant 1 : index
    %c0_4 = arith.constant 0 : index
    %c0_5 = arith.constant 0 : index
    %5 = vector.load %arg1[%c1, %c0_4, %c0_5] : memref<2x16x32xf32, #tpu.memory_space<vmem>>, vector<1x16x32xf32>
    %6 = vector.shape_cast %5 : vector<1x16x32xf32> to vector<16x32xf32>
    %c1_6 = arith.constant 1 : index
    %c16_7 = arith.constant 16 : index
    %c0_8 = arith.constant 0 : index
    %7 = vector.load %arg7[%c1_6, %c16_7, %c0_8] : memref<2x32x32xf32, #tpu.memory_space<vmem>>, vector<1x16x32xf32>
    %8 = vector.shape_cast %7 : vector<1x16x32xf32> to vector<16x32xf32>
    %9 = vector.shape_cast %6 : vector<16x32xf32> to vector<1x16x32xf32>
    tpu.vector_store %arg7[%c1_6, %c16_7, %c0_8], %9 {strides = array<i32>} : memref<2x32x32xf32, #tpu.memory_space<vmem>>, vector<1x16x32xf32>,
    %c0_9 = arith.constant 0 : index
    %c0_10 = arith.constant 0 : index
    %c0_11 = arith.constant 0 : index
    %10 = vector.load %arg3[%c0_9, %c0_10, %c0_11] : memref<4x16x32xf32, #tpu.memory_space<vmem>>, vector<1x16x32xf32>
    %11 = vector.shape_cast %10 : vector<1x16x32xf32> to vector<16x32xf32>
    %12 = vector.extract_strided_slice %11 {offsets = [0, 0], sizes = [1, 32], strides = [1, 1]} : vector<16x32xf32> to vector<1x32xf32>
    %13 = vector.extract_strided_slice %11 {offsets = [1, 0], sizes = [1, 32], strides = [1, 1]} : vector<16x32xf32> to vector<1x32xf32>
    %14 = vector.extract_strided_slice %11 {offsets = [2, 0], sizes = [1, 32], strides = [1, 1]} : vector<16x32xf32> to vector<1x32xf32>
    %15 = vector.extract_strided_slice %11 {offsets = [3, 0], sizes = [1, 32], strides = [1, 1]} : vector<16x32xf32> to vector<1x32xf32>
    %16 = vector.extract_strided_slice %11 {offsets = [4, 0], sizes = [1, 32], strides = [1, 1]} : vector<16x32xf32> to vector<1x32xf32>
    %17 = vector.extract_strided_slice %11 {offsets = [5, 0], sizes = [1, 32], strides = [1, 1]} : vector<16x32xf32> to vector<1x32xf32>
    %18 = vector.extract_strided_slice %11 {offsets = [6, 0], sizes = [1, 32], strides = [1, 1]} : vector<16x32xf32> to vector<1x32xf32>
    %19 = vector.extract_strided_slice %11 {offsets = [7, 0], sizes = [1, 32], strides = [1, 1]} : vector<16x32xf32> to vector<1x32xf32>
    %20 = vector.extract_strided_slice %11 {offsets = [8, 0], sizes = [1, 32], strides = [1, 1]} : vector<16x32xf32> to vector<1x32xf32>
    %c0_12 = arith.constant 0 : index
    %c0_13 = arith.constant 0 : index
    %c0_14 = arith.constant 0 : index
    %21 = vector.load %arg2[%c0_12, %c0_13, %c0_14] : memref<2x30x32xf32, #tpu.memory_space<vmem>>, vector<1x2x32xf32>
    %22 = vector.shape_cast %21 : vector<1x2x32xf32> to vector<2x32xf32>
    %c0_15 = arith.constant 0 : index
    %c14 = arith.constant 14 : index
    %c0_16 = arith.constant 0 : index
    %23 = vector.load %arg7[%c0_15, %c14, %c0_16] : memref<2x32x32xf32, #tpu.memory_space<vmem>>, vector<1x2x32xf32>
    %24 = vector.shape_cast %23 : vector<1x2x32xf32> to vector<2x32xf32>
    %25 = vector.shape_cast %22 : vector<2x32xf32> to vector<1x2x32xf32>
    tpu.vector_store %arg7[%c0_15, %c14, %c0_16], %25 {strides = array<i32>} : memref<2x32x32xf32, #tpu.memory_space<vmem>>, vector<1x2x32xf32>,
    %c0_17 = arith.constant 0 : index
    %c30 = arith.constant 30 : index
    %c0_18 = arith.constant 0 : index
    %26 = vector.load %arg7[%c0_17, %c30, %c0_18] : memref<2x32x32xf32, #tpu.memory_space<vmem>>, vector<1x2x32xf32>
    %27 = vector.shape_cast %26 : vector<1x2x32xf32> to vector<2x32xf32>
    %c0_19 = arith.constant 0 : index
    %c0_20 = arith.constant 0 : index
    %c0_21 = arith.constant 0 : index
    %28 = vector.load %arg6[%c0_19, %c0_20, %c0_21] : memref<2x30x32xf32, #tpu.memory_space<vmem>>, vector<1x2x32xf32>
    %29 = vector.shape_cast %28 : vector<1x2x32xf32> to vector<2x32xf32>
    %30 = vector.shape_cast %27 : vector<2x32xf32> to vector<1x2x32xf32>
    tpu.vector_store %arg6[%c0_19, %c0_20, %c0_21], %30 {strides = array<i32>} : memref<2x30x32xf32, #tpu.memory_space<vmem>>, vector<1x2x32xf32>,
    %c0_22 = arith.constant 0 : index
    %c14_23 = arith.constant 14 : index
    %c0_24 = arith.constant 0 : index
    %31 = vector.load %arg7[%c0_22, %c14_23, %c0_24] : memref<2x32x32xf32, #tpu.memory_space<vmem>>, vector<1x16x32xf32>
    %32 = vector.shape_cast %31 : vector<1x16x32xf32> to vector<16x32xf32>
    %c0_25 = arith.constant 0 : index
    %c15 = arith.constant 15 : index
    %c0_26 = arith.constant 0 : index
    %33 = vector.load %arg7[%c0_25, %c15, %c0_26] : memref<2x32x32xf32, #tpu.memory_space<vmem>>, vector<1x16x32xf32>
    %34 = vector.shape_cast %33 : vector<1x16x32xf32> to vector<16x32xf32>
    %c0_27 = arith.constant 0 : index
    %c16_28 = arith.constant 16 : index
    %c0_29 = arith.constant 0 : index
    %35 = vector.load %arg7[%c0_27, %c16_28, %c0_29] : memref<2x32x32xf32, #tpu.memory_space<vmem>>, vector<1x16x32xf32>
    %36 = vector.shape_cast %35 : vector<1x16x32xf32> to vector<16x32xf32>
    %37 = vector.broadcast %12 : vector<1x32xf32> to vector<16x32xf32>
    %38 = arith.mulf %32, %37 : vector<16x32xf32>
    %39 = vector.broadcast %13 : vector<1x32xf32> to vector<16x32xf32>
    %40 = arith.mulf %34, %39 : vector<16x32xf32>
    %41 = arith.addf %38, %40 : vector<16x32xf32>
    %42 = vector.broadcast %14 : vector<1x32xf32> to vector<16x32xf32>
    %43 = arith.mulf %36, %42 : vector<16x32xf32>
    %44 = arith.addf %41, %43 : vector<16x32xf32>
    %45 = vector.broadcast %15 : vector<1x32xf32> to vector<16x32xf32>
    %46 = arith.addf %44, %45 : vector<16x32xf32>
    %c1_30 = arith.constant 1 : index
    %c0_31 = arith.constant 0 : index
    %c0_32 = arith.constant 0 : index
    %47 = vector.load %arg2[%c1_30, %c0_31, %c0_32] : memref<2x30x32xf32, #tpu.memory_space<vmem>>, vector<1x2x32xf32>
    %48 = vector.shape_cast %47 : vector<1x2x32xf32> to vector<2x32xf32>
    %c1_33 = arith.constant 1 : index
    %c14_34 = arith.constant 14 : index
    %c0_35 = arith.constant 0 : index
    %49 = vector.load %arg7[%c1_33, %c14_34, %c0_35] : memref<2x32x32xf32, #tpu.memory_space<vmem>>, vector<1x2x32xf32>
    %50 = vector.shape_cast %49 : vector<1x2x32xf32> to vector<2x32xf32>
    %51 = vector.shape_cast %48 : vector<2x32xf32> to vector<1x2x32xf32>
    tpu.vector_store %arg7[%c1_33, %c14_34, %c0_35], %51 {strides = array<i32>} : memref<2x32x32xf32, #tpu.memory_space<vmem>>, vector<1x2x32xf32>,
    %c1_36 = arith.constant 1 : index
    %c30_37 = arith.constant 30 : index
    %c0_38 = arith.constant 0 : index
    %52 = vector.load %arg7[%c1_36, %c30_37, %c0_38] : memref<2x32x32xf32, #tpu.memory_space<vmem>>, vector<1x2x32xf32>
    %53 = vector.shape_cast %52 : vector<1x2x32xf32> to vector<2x32xf32>
    %c1_39 = arith.constant 1 : index
    %c0_40 = arith.constant 0 : index
    %c0_41 = arith.constant 0 : index
    %54 = vector.load %arg6[%c1_39, %c0_40, %c0_41] : memref<2x30x32xf32, #tpu.memory_space<vmem>>, vector<1x2x32xf32>
    %55 = vector.shape_cast %54 : vector<1x2x32xf32> to vector<2x32xf32>
    %56 = vector.shape_cast %53 : vector<2x32xf32> to vector<1x2x32xf32>
    tpu.vector_store %arg6[%c1_39, %c0_40, %c0_41], %56 {strides = array<i32>} : memref<2x30x32xf32, #tpu.memory_space<vmem>>, vector<1x2x32xf32>,
    %c1_42 = arith.constant 1 : index
    %c14_43 = arith.constant 14 : index
    %c0_44 = arith.constant 0 : index
    %57 = vector.load %arg7[%c1_42, %c14_43, %c0_44] : memref<2x32x32xf32, #tpu.memory_space<vmem>>, vector<1x16x32xf32>
    %58 = vector.shape_cast %57 : vector<1x16x32xf32> to vector<16x32xf32>
    %c1_45 = arith.constant 1 : index
    %c15_46 = arith.constant 15 : index
    %c0_47 = arith.constant 0 : index
    %59 = vector.load %arg7[%c1_45, %c15_46, %c0_47] : memref<2x32x32xf32, #tpu.memory_space<vmem>>, vector<1x16x32xf32>
    %60 = vector.shape_cast %59 : vector<1x16x32xf32> to vector<16x32xf32>
    %c1_48 = arith.constant 1 : index
    %c16_49 = arith.constant 16 : index
    %c0_50 = arith.constant 0 : index
    %61 = vector.load %arg7[%c1_48, %c16_49, %c0_50] : memref<2x32x32xf32, #tpu.memory_space<vmem>>, vector<1x16x32xf32>
    %62 = vector.shape_cast %61 : vector<1x16x32xf32> to vector<16x32xf32>
    %63 = vector.broadcast %12 : vector<1x32xf32> to vector<16x32xf32>
    %64 = arith.mulf %58, %63 : vector<16x32xf32>
    %65 = vector.broadcast %13 : vector<1x32xf32> to vector<16x32xf32>
    %66 = arith.mulf %60, %65 : vector<16x32xf32>
    %67 = arith.addf %64, %66 : vector<16x32xf32>
    %68 = vector.broadcast %14 : vector<1x32xf32> to vector<16x32xf32>
    %69 = arith.mulf %62, %68 : vector<16x32xf32>
    %70 = arith.addf %67, %69 : vector<16x32xf32>
    %71 = vector.broadcast %15 : vector<1x32xf32> to vector<16x32xf32>
    %72 = arith.addf %70, %71 : vector<16x32xf32>
    %73 = tpu.concatenate %46, %72 in 0 : vector<16x32xf32>, vector<16x32xf32> -> vector<32x32xf32>
    %cst = arith.constant dense<0.000000e+00> : vector<32xf32>
    %74 = vector.multi_reduction <add>, %73, %cst [1] : vector<32x32xf32> to vector<32xf32>
    %75 = vector.shape_cast %74 : vector<32xf32> to vector<32x1xf32>
    %cst_51 = arith.constant 3.125000e-02 : f32
    %76 = vector.broadcast %cst_51 : f32 to vector<32x1xf32>
    %77 = arith.mulf %75, %76 : vector<32x1xf32>
    %78 = vector.broadcast %77 : vector<32x1xf32> to vector<32x32xf32>
    %79 = arith.subf %73, %78 : vector<32x32xf32>
    %80 = arith.mulf %79, %79 : vector<32x32xf32>
    %cst_52 = arith.constant dense<0.000000e+00> : vector<32xf32>
    %81 = vector.multi_reduction <add>, %80, %cst_52 [1] : vector<32x32xf32> to vector<32xf32>
    %82 = vector.shape_cast %81 : vector<32xf32> to vector<32x1xf32>
    %cst_53 = arith.constant 3.125000e-02 : f32
    %83 = vector.broadcast %cst_53 : f32 to vector<32x1xf32>
    %84 = arith.mulf %82, %83 : vector<32x1xf32>
    %cst_54 = arith.constant 9.99999974E-6 : f32
    %85 = vector.broadcast %cst_54 : f32 to vector<32x1xf32>
    %86 = arith.addf %84, %85 : vector<32x1xf32>
    %87 = math.rsqrt %86 : vector<32x1xf32>
    %88 = vector.broadcast %87 : vector<32x1xf32> to vector<32x32xf32>
    %89 = arith.mulf %79, %88 : vector<32x32xf32>
    %90 = vector.broadcast %16 : vector<1x32xf32> to vector<32x32xf32>
    %91 = arith.mulf %89, %90 : vector<32x32xf32>
    %92 = vector.broadcast %17 : vector<1x32xf32> to vector<32x32xf32>
    %93 = arith.addf %91, %92 : vector<32x32xf32>
    %cst_55 = arith.constant 0.000000e+00 : f32
    %94 = vector.broadcast %cst_55 : f32 to vector<32x32xf32>
    %95 = arith.maximumf %93, %94 : vector<32x32xf32>
    %c0_56 = arith.constant 0 : index
    %c0_57 = arith.constant 0 : index
    %c0_58 = arith.constant 0 : index
    %96 = vector.load %arg4[%c0_56, %c0_57, %c0_58] : memref<4x32x32xf32, #tpu.memory_space<vmem>>, vector<1x32x32xf32>
    %97 = vector.shape_cast %96 : vector<1x32x32xf32> to vector<32x32xf32>
    %cst_59 = arith.constant dense<0.000000e+00> : vector<32x32xf32>
    %98 = tpu.matmul %95, %97, %cst_59 {dimension_numbers = #tpu.dot_dimension_numbers<[1], [0], [0], [1], [0, 0, 1, 1], [], []>} : vector<32x32xf32>, vector<32x32xf32>, vector<32x32xf32> -> vector<32x32xf32>
    %99 = vector.broadcast %18 : vector<1x32xf32> to vector<32x32xf32>
    %100 = arith.addf %98, %99 : vector<32x32xf32>
    %cst_60 = arith.constant dense<0.000000e+00> : vector<32xf32>
    %101 = vector.multi_reduction <add>, %100, %cst_60 [1] : vector<32x32xf32> to vector<32xf32>
    %102 = vector.shape_cast %101 : vector<32xf32> to vector<32x1xf32>
    %cst_61 = arith.constant 3.125000e-02 : f32
    %103 = vector.broadcast %cst_61 : f32 to vector<32x1xf32>
    %104 = arith.mulf %102, %103 : vector<32x1xf32>
    %105 = vector.broadcast %104 : vector<32x1xf32> to vector<32x32xf32>
    %106 = arith.subf %100, %105 : vector<32x32xf32>
    %107 = arith.mulf %106, %106 : vector<32x32xf32>
    %cst_62 = arith.constant dense<0.000000e+00> : vector<32xf32>
    %108 = vector.multi_reduction <add>, %107, %cst_62 [1] : vector<32x32xf32> to vector<32xf32>
    %109 = vector.shape_cast %108 : vector<32xf32> to vector<32x1xf32>
    %cst_63 = arith.constant 3.125000e-02 : f32
    %110 = vector.broadcast %cst_63 : f32 to vector<32x1xf32>
    %111 = arith.mulf %109, %110 : vector<32x1xf32>
    %cst_64 = arith.constant 9.99999974E-6 : f32
    %112 = vector.broadcast %cst_64 : f32 to vector<32x1xf32>
    %113 = arith.addf %111, %112 : vector<32x1xf32>
    %114 = math.rsqrt %113 : vector<32x1xf32>
    %115 = vector.broadcast %114 : vector<32x1xf32> to vector<32x32xf32>
    %116 = arith.mulf %106, %115 : vector<32x32xf32>
    %117 = vector.broadcast %19 : vector<1x32xf32> to vector<32x32xf32>
    %118 = arith.mulf %116, %117 : vector<32x32xf32>
    %119 = vector.broadcast %20 : vector<1x32xf32> to vector<32x32xf32>
    %120 = arith.addf %118, %119 : vector<32x32xf32>
    %cst_65 = arith.constant 0.000000e+00 : f32
    %121 = vector.broadcast %cst_65 : f32 to vector<32x32xf32>
    %122 = arith.maximumf %120, %121 : vector<32x32xf32>
    %c0_66 = arith.constant 0 : index
    %c16_67 = arith.constant 16 : index
    %c0_68 = arith.constant 0 : index
    %123 = vector.load %arg7[%c0_66, %c16_67, %c0_68] : memref<2x32x32xf32, #tpu.memory_space<vmem>>, vector<1x16x32xf32>
    %124 = vector.shape_cast %123 : vector<1x16x32xf32> to vector<16x32xf32>
    %125 = vector.extract_strided_slice %122 {offsets = [0, 0], sizes = [16, 32], strides = [1, 1]} : vector<32x32xf32> to vector<16x32xf32>
    %126 = arith.addf %124, %125 : vector<16x32xf32>
    %c0_69 = arith.constant 0 : index
    %c16_70 = arith.constant 16 : index
    %c0_71 = arith.constant 0 : index
    %127 = vector.load %arg7[%c0_69, %c16_70, %c0_71] : memref<2x32x32xf32, #tpu.memory_space<vmem>>, vector<1x16x32xf32>
    %128 = vector.shape_cast %127 : vector<1x16x32xf32> to vector<16x32xf32>
    %129 = vector.shape_cast %126 : vector<16x32xf32> to vector<1x16x32xf32>
    tpu.vector_store %arg7[%c0_69, %c16_70, %c0_71], %129 {strides = array<i32>} : memref<2x32x32xf32, #tpu.memory_space<vmem>>, vector<1x16x32xf32>,
    %c1_72 = arith.constant 1 : index
    %c16_73 = arith.constant 16 : index
    %c0_74 = arith.constant 0 : index
    %130 = vector.load %arg7[%c1_72, %c16_73, %c0_74] : memref<2x32x32xf32, #tpu.memory_space<vmem>>, vector<1x16x32xf32>
    %131 = vector.shape_cast %130 : vector<1x16x32xf32> to vector<16x32xf32>
    %132 = vector.extract_strided_slice %122 {offsets = [16, 0], sizes = [16, 32], strides = [1, 1]} : vector<32x32xf32> to vector<16x32xf32>
    %133 = arith.addf %131, %132 : vector<16x32xf32>
    %c1_75 = arith.constant 1 : index
    %c16_76 = arith.constant 16 : index
    %c0_77 = arith.constant 0 : index
    %134 = vector.load %arg7[%c1_75, %c16_76, %c0_77] : memref<2x32x32xf32, #tpu.memory_space<vmem>>, vector<1x16x32xf32>
    %135 = vector.shape_cast %134 : vector<1x16x32xf32> to vector<16x32xf32>
    %136 = vector.shape_cast %133 : vector<16x32xf32> to vector<1x16x32xf32>
    tpu.vector_store %arg7[%c1_75, %c16_76, %c0_77], %136 {strides = array<i32>} : memref<2x32x32xf32, #tpu.memory_space<vmem>>, vector<1x16x32xf32>,
    %c1_78 = arith.constant 1 : index
    %c0_79 = arith.constant 0 : index
    %c0_80 = arith.constant 0 : index
    %137 = vector.load %arg3[%c1_78, %c0_79, %c0_80] : memref<4x16x32xf32, #tpu.memory_space<vmem>>, vector<1x16x32xf32>
    %138 = vector.shape_cast %137 : vector<1x16x32xf32> to vector<16x32xf32>
    %139 = vector.extract_strided_slice %138 {offsets = [0, 0], sizes = [1, 32], strides = [1, 1]} : vector<16x32xf32> to vector<1x32xf32>
    %140 = vector.extract_strided_slice %138 {offsets = [1, 0], sizes = [1, 32], strides = [1, 1]} : vector<16x32xf32> to vector<1x32xf32>
    %141 = vector.extract_strided_slice %138 {offsets = [2, 0], sizes = [1, 32], strides = [1, 1]} : vector<16x32xf32> to vector<1x32xf32>
    %142 = vector.extract_strided_slice %138 {offsets = [3, 0], sizes = [1, 32], strides = [1, 1]} : vector<16x32xf32> to vector<1x32xf32>
    %143 = vector.extract_strided_slice %138 {offsets = [4, 0], sizes = [1, 32], strides = [1, 1]} : vector<16x32xf32> to vector<1x32xf32>
    %144 = vector.extract_strided_slice %138 {offsets = [5, 0], sizes = [1, 32], strides = [1, 1]} : vector<16x32xf32> to vector<1x32xf32>
    %145 = vector.extract_strided_slice %138 {offsets = [6, 0], sizes = [1, 32], strides = [1, 1]} : vector<16x32xf32> to vector<1x32xf32>
    %146 = vector.extract_strided_slice %138 {offsets = [7, 0], sizes = [1, 32], strides = [1, 1]} : vector<16x32xf32> to vector<1x32xf32>
    %147 = vector.extract_strided_slice %138 {offsets = [8, 0], sizes = [1, 32], strides = [1, 1]} : vector<16x32xf32> to vector<1x32xf32>
    %c0_81 = arith.constant 0 : index
    %c2 = arith.constant 2 : index
    %c0_82 = arith.constant 0 : index
    %148 = vector.load %arg2[%c0_81, %c2, %c0_82] : memref<2x30x32xf32, #tpu.memory_space<vmem>>, vector<1x4x32xf32>
    %149 = vector.shape_cast %148 : vector<1x4x32xf32> to vector<4x32xf32>
    %c0_83 = arith.constant 0 : index
    %c12 = arith.constant 12 : index
    %c0_84 = arith.constant 0 : index
    %150 = vector.load %arg7[%c0_83, %c12, %c0_84] : memref<2x32x32xf32, #tpu.memory_space<vmem>>, vector<1x4x32xf32>
    %151 = vector.shape_cast %150 : vector<1x4x32xf32> to vector<4x32xf32>
    %152 = vector.shape_cast %149 : vector<4x32xf32> to vector<1x4x32xf32>
    tpu.vector_store %arg7[%c0_83, %c12, %c0_84], %152 {strides = array<i32>} : memref<2x32x32xf32, #tpu.memory_space<vmem>>, vector<1x4x32xf32>,
    %c0_85 = arith.constant 0 : index
    %c28 = arith.constant 28 : index
    %c0_86 = arith.constant 0 : index
    %153 = vector.load %arg7[%c0_85, %c28, %c0_86] : memref<2x32x32xf32, #tpu.memory_space<vmem>>, vector<1x4x32xf32>
    %154 = vector.shape_cast %153 : vector<1x4x32xf32> to vector<4x32xf32>
    %c0_87 = arith.constant 0 : index
    %c2_88 = arith.constant 2 : index
    %c0_89 = arith.constant 0 : index
    %155 = vector.load %arg6[%c0_87, %c2_88, %c0_89] : memref<2x30x32xf32, #tpu.memory_space<vmem>>, vector<1x4x32xf32>
    %156 = vector.shape_cast %155 : vector<1x4x32xf32> to vector<4x32xf32>
    %157 = vector.shape_cast %154 : vector<4x32xf32> to vector<1x4x32xf32>
    tpu.vector_store %arg6[%c0_87, %c2_88, %c0_89], %157 {strides = array<i32>} : memref<2x30x32xf32, #tpu.memory_space<vmem>>, vector<1x4x32xf32>,
    %c0_90 = arith.constant 0 : index
    %c12_91 = arith.constant 12 : index
    %c0_92 = arith.constant 0 : index
    %158 = vector.load %arg7[%c0_90, %c12_91, %c0_92] : memref<2x32x32xf32, #tpu.memory_space<vmem>>, vector<1x16x32xf32>
    %159 = vector.shape_cast %158 : vector<1x16x32xf32> to vector<16x32xf32>
    %c0_93 = arith.constant 0 : index
    %c14_94 = arith.constant 14 : index
    %c0_95 = arith.constant 0 : index
    %160 = vector.load %arg7[%c0_93, %c14_94, %c0_95] : memref<2x32x32xf32, #tpu.memory_space<vmem>>, vector<1x16x32xf32>
    %161 = vector.shape_cast %160 : vector<1x16x32xf32> to vector<16x32xf32>
    %c0_96 = arith.constant 0 : index
    %c16_97 = arith.constant 16 : index
    %c0_98 = arith.constant 0 : index
    %162 = vector.load %arg7[%c0_96, %c16_97, %c0_98] : memref<2x32x32xf32, #tpu.memory_space<vmem>>, vector<1x16x32xf32>
    %163 = vector.shape_cast %162 : vector<1x16x32xf32> to vector<16x32xf32>
    %164 = vector.broadcast %139 : vector<1x32xf32> to vector<16x32xf32>
    %165 = arith.mulf %159, %164 : vector<16x32xf32>
    %166 = vector.broadcast %140 : vector<1x32xf32> to vector<16x32xf32>
    %167 = arith.mulf %161, %166 : vector<16x32xf32>
    %168 = arith.addf %165, %167 : vector<16x32xf32>
    %169 = vector.broadcast %141 : vector<1x32xf32> to vector<16x32xf32>
    %170 = arith.mulf %163, %169 : vector<16x32xf32>
    %171 = arith.addf %168, %170 : vector<16x32xf32>
    %172 = vector.broadcast %142 : vector<1x32xf32> to vector<16x32xf32>
    %173 = arith.addf %171, %172 : vector<16x32xf32>
    %c1_99 = arith.constant 1 : index
    %c2_100 = arith.constant 2 : index
    %c0_101 = arith.constant 0 : index
    %174 = vector.load %arg2[%c1_99, %c2_100, %c0_101] : memref<2x30x32xf32, #tpu.memory_space<vmem>>, vector<1x4x32xf32>
    %175 = vector.shape_cast %174 : vector<1x4x32xf32> to vector<4x32xf32>
    %c1_102 = arith.constant 1 : index
    %c12_103 = arith.constant 12 : index
    %c0_104 = arith.constant 0 : index
    %176 = vector.load %arg7[%c1_102, %c12_103, %c0_104] : memref<2x32x32xf32, #tpu.memory_space<vmem>>, vector<1x4x32xf32>
    %177 = vector.shape_cast %176 : vector<1x4x32xf32> to vector<4x32xf32>
    %178 = vector.shape_cast %175 : vector<4x32xf32> to vector<1x4x32xf32>
    tpu.vector_store %arg7[%c1_102, %c12_103, %c0_104], %178 {strides = array<i32>} : memref<2x32x32xf32, #tpu.memory_space<vmem>>, vector<1x4x32xf32>,
    %c1_105 = arith.constant 1 : index
    %c28_106 = arith.constant 28 : index
    %c0_107 = arith.constant 0 : index
    %179 = vector.load %arg7[%c1_105, %c28_106, %c0_107] : memref<2x32x32xf32, #tpu.memory_space<vmem>>, vector<1x4x32xf32>
    %180 = vector.shape_cast %179 : vector<1x4x32xf32> to vector<4x32xf32>
    %c1_108 = arith.constant 1 : index
    %c2_109 = arith.constant 2 : index
    %c0_110 = arith.constant 0 : index
    %181 = vector.load %arg6[%c1_108, %c2_109, %c0_110] : memref<2x30x32xf32, #tpu.memory_space<vmem>>, vector<1x4x32xf32>
    %182 = vector.shape_cast %181 : vector<1x4x32xf32> to vector<4x32xf32>
    %183 = vector.shape_cast %180 : vector<4x32xf32> to vector<1x4x32xf32>
    tpu.vector_store %arg6[%c1_108, %c2_109, %c0_110], %183 {strides = array<i32>} : memref<2x30x32xf32, #tpu.memory_space<vmem>>, vector<1x4x32xf32>,
    %c1_111 = arith.constant 1 : index
    %c12_112 = arith.constant 12 : index
    %c0_113 = arith.constant 0 : index
    %184 = vector.load %arg7[%c1_111, %c12_112, %c0_113] : memref<2x32x32xf32, #tpu.memory_space<vmem>>, vector<1x16x32xf32>
    %185 = vector.shape_cast %184 : vector<1x16x32xf32> to vector<16x32xf32>
    %c1_114 = arith.constant 1 : index
    %c14_115 = arith.constant 14 : index
    %c0_116 = arith.constant 0 : index
    %186 = vector.load %arg7[%c1_114, %c14_115, %c0_116] : memref<2x32x32xf32, #tpu.memory_space<vmem>>, vector<1x16x32xf32>
    %187 = vector.shape_cast %186 : vector<1x16x32xf32> to vector<16x32xf32>
    %c1_117 = arith.constant 1 : index
    %c16_118 = arith.constant 16 : index
    %c0_119 = arith.constant 0 : index
    %188 = vector.load %arg7[%c1_117, %c16_118, %c0_119] : memref<2x32x32xf32, #tpu.memory_space<vmem>>, vector<1x16x32xf32>
    %189 = vector.shape_cast %188 : vector<1x16x32xf32> to vector<16x32xf32>
    %190 = vector.broadcast %139 : vector<1x32xf32> to vector<16x32xf32>
    %191 = arith.mulf %185, %190 : vector<16x32xf32>
    %192 = vector.broadcast %140 : vector<1x32xf32> to vector<16x32xf32>
    %193 = arith.mulf %187, %192 : vector<16x32xf32>
    %194 = arith.addf %191, %193 : vector<16x32xf32>
    %195 = vector.broadcast %141 : vector<1x32xf32> to vector<16x32xf32>
    %196 = arith.mulf %189, %195 : vector<16x32xf32>
    %197 = arith.addf %194, %196 : vector<16x32xf32>
    %198 = vector.broadcast %142 : vector<1x32xf32> to vector<16x32xf32>
    %199 = arith.addf %197, %198 : vector<16x32xf32>
    %200 = tpu.concatenate %173, %199 in 0 : vector<16x32xf32>, vector<16x32xf32> -> vector<32x32xf32>
    %cst_120 = arith.constant dense<0.000000e+00> : vector<32xf32>
    %201 = vector.multi_reduction <add>, %200, %cst_120 [1] : vector<32x32xf32> to vector<32xf32>
    %202 = vector.shape_cast %201 : vector<32xf32> to vector<32x1xf32>
    %cst_121 = arith.constant 3.125000e-02 : f32
    %203 = vector.broadcast %cst_121 : f32 to vector<32x1xf32>
    %204 = arith.mulf %202, %203 : vector<32x1xf32>
    %205 = vector.broadcast %204 : vector<32x1xf32> to vector<32x32xf32>
    %206 = arith.subf %200, %205 : vector<32x32xf32>
    %207 = arith.mulf %206, %206 : vector<32x32xf32>
    %cst_122 = arith.constant dense<0.000000e+00> : vector<32xf32>
    %208 = vector.multi_reduction <add>, %207, %cst_122 [1] : vector<32x32xf32> to vector<32xf32>
    %209 = vector.shape_cast %208 : vector<32xf32> to vector<32x1xf32>
    %cst_123 = arith.constant 3.125000e-02 : f32
    %210 = vector.broadcast %cst_123 : f32 to vector<32x1xf32>
    %211 = arith.mulf %209, %210 : vector<32x1xf32>
    %cst_124 = arith.constant 9.99999974E-6 : f32
    %212 = vector.broadcast %cst_124 : f32 to vector<32x1xf32>
    %213 = arith.addf %211, %212 : vector<32x1xf32>
    %214 = math.rsqrt %213 : vector<32x1xf32>
    %215 = vector.broadcast %214 : vector<32x1xf32> to vector<32x32xf32>
    %216 = arith.mulf %206, %215 : vector<32x32xf32>
    %217 = vector.broadcast %143 : vector<1x32xf32> to vector<32x32xf32>
    %218 = arith.mulf %216, %217 : vector<32x32xf32>
    %219 = vector.broadcast %144 : vector<1x32xf32> to vector<32x32xf32>
    %220 = arith.addf %218, %219 : vector<32x32xf32>
    %cst_125 = arith.constant 0.000000e+00 : f32
    %221 = vector.broadcast %cst_125 : f32 to vector<32x32xf32>
    %222 = arith.maximumf %220, %221 : vector<32x32xf32>
    %c1_126 = arith.constant 1 : index
    %c0_127 = arith.constant 0 : index
    %c0_128 = arith.constant 0 : index
    %223 = vector.load %arg4[%c1_126, %c0_127, %c0_128] : memref<4x32x32xf32, #tpu.memory_space<vmem>>, vector<1x32x32xf32>
    %224 = vector.shape_cast %223 : vector<1x32x32xf32> to vector<32x32xf32>
    %cst_129 = arith.constant dense<0.000000e+00> : vector<32x32xf32>
    %225 = tpu.matmul %222, %224, %cst_129 {dimension_numbers = #tpu.dot_dimension_numbers<[1], [0], [0], [1], [0, 0, 1, 1], [], []>} : vector<32x32xf32>, vector<32x32xf32>, vector<32x32xf32> -> vector<32x32xf32>
    %226 = vector.broadcast %145 : vector<1x32xf32> to vector<32x32xf32>
    %227 = arith.addf %225, %226 : vector<32x32xf32>
    %cst_130 = arith.constant dense<0.000000e+00> : vector<32xf32>
    %228 = vector.multi_reduction <add>, %227, %cst_130 [1] : vector<32x32xf32> to vector<32xf32>
    %229 = vector.shape_cast %228 : vector<32xf32> to vector<32x1xf32>
    %cst_131 = arith.constant 3.125000e-02 : f32
    %230 = vector.broadcast %cst_131 : f32 to vector<32x1xf32>
    %231 = arith.mulf %229, %230 : vector<32x1xf32>
    %232 = vector.broadcast %231 : vector<32x1xf32> to vector<32x32xf32>
    %233 = arith.subf %227, %232 : vector<32x32xf32>
    %234 = arith.mulf %233, %233 : vector<32x32xf32>
    %cst_132 = arith.constant dense<0.000000e+00> : vector<32xf32>
    %235 = vector.multi_reduction <add>, %234, %cst_132 [1] : vector<32x32xf32> to vector<32xf32>
    %236 = vector.shape_cast %235 : vector<32xf32> to vector<32x1xf32>
    %cst_133 = arith.constant 3.125000e-02 : f32
    %237 = vector.broadcast %cst_133 : f32 to vector<32x1xf32>
    %238 = arith.mulf %236, %237 : vector<32x1xf32>
    %cst_134 = arith.constant 9.99999974E-6 : f32
    %239 = vector.broadcast %cst_134 : f32 to vector<32x1xf32>
    %240 = arith.addf %238, %239 : vector<32x1xf32>
    %241 = math.rsqrt %240 : vector<32x1xf32>
    %242 = vector.broadcast %241 : vector<32x1xf32> to vector<32x32xf32>
    %243 = arith.mulf %233, %242 : vector<32x32xf32>
    %244 = vector.broadcast %146 : vector<1x32xf32> to vector<32x32xf32>
    %245 = arith.mulf %243, %244 : vector<32x32xf32>
    %246 = vector.broadcast %147 : vector<1x32xf32> to vector<32x32xf32>
    %247 = arith.addf %245, %246 : vector<32x32xf32>
    %cst_135 = arith.constant 0.000000e+00 : f32
    %248 = vector.broadcast %cst_135 : f32 to vector<32x32xf32>
    %249 = arith.maximumf %247, %248 : vector<32x32xf32>
    %c0_136 = arith.constant 0 : index
    %c16_137 = arith.constant 16 : index
    %c0_138 = arith.constant 0 : index
    %250 = vector.load %arg7[%c0_136, %c16_137, %c0_138] : memref<2x32x32xf32, #tpu.memory_space<vmem>>, vector<1x16x32xf32>
    %251 = vector.shape_cast %250 : vector<1x16x32xf32> to vector<16x32xf32>
    %252 = vector.extract_strided_slice %249 {offsets = [0, 0], sizes = [16, 32], strides = [1, 1]} : vector<32x32xf32> to vector<16x32xf32>
    %253 = arith.addf %251, %252 : vector<16x32xf32>
    %c0_139 = arith.constant 0 : index
    %c16_140 = arith.constant 16 : index
    %c0_141 = arith.constant 0 : index
    %254 = vector.load %arg7[%c0_139, %c16_140, %c0_141] : memref<2x32x32xf32, #tpu.memory_space<vmem>>, vector<1x16x32xf32>
    %255 = vector.shape_cast %254 : vector<1x16x32xf32> to vector<16x32xf32>
    %256 = vector.shape_cast %253 : vector<16x32xf32> to vector<1x16x32xf32>
    tpu.vector_store %arg7[%c0_139, %c16_140, %c0_141], %256 {strides = array<i32>} : memref<2x32x32xf32, #tpu.memory_space<vmem>>, vector<1x16x32xf32>,
    %c1_142 = arith.constant 1 : index
    %c16_143 = arith.constant 16 : index
    %c0_144 = arith.constant 0 : index
    %257 = vector.load %arg7[%c1_142, %c16_143, %c0_144] : memref<2x32x32xf32, #tpu.memory_space<vmem>>, vector<1x16x32xf32>
    %258 = vector.shape_cast %257 : vector<1x16x32xf32> to vector<16x32xf32>
    %259 = vector.extract_strided_slice %249 {offsets = [16, 0], sizes = [16, 32], strides = [1, 1]} : vector<32x32xf32> to vector<16x32xf32>
    %260 = arith.addf %258, %259 : vector<16x32xf32>
    %c1_145 = arith.constant 1 : index
    %c16_146 = arith.constant 16 : index
    %c0_147 = arith.constant 0 : index
    %261 = vector.load %arg7[%c1_145, %c16_146, %c0_147] : memref<2x32x32xf32, #tpu.memory_space<vmem>>, vector<1x16x32xf32>
    %262 = vector.shape_cast %261 : vector<1x16x32xf32> to vector<16x32xf32>
    %263 = vector.shape_cast %260 : vector<16x32xf32> to vector<1x16x32xf32>
    tpu.vector_store %arg7[%c1_145, %c16_146, %c0_147], %263 {strides = array<i32>} : memref<2x32x32xf32, #tpu.memory_space<vmem>>, vector<1x16x32xf32>,
    %c2_148 = arith.constant 2 : index
    %c0_149 = arith.constant 0 : index
    %c0_150 = arith.constant 0 : index
    %264 = vector.load %arg3[%c2_148, %c0_149, %c0_150] : memref<4x16x32xf32, #tpu.memory_space<vmem>>, vector<1x16x32xf32>
    %265 = vector.shape_cast %264 : vector<1x16x32xf32> to vector<16x32xf32>
    %266 = vector.extract_strided_slice %265 {offsets = [0, 0], sizes = [1, 32], strides = [1, 1]} : vector<16x32xf32> to vector<1x32xf32>
    %267 = vector.extract_strided_slice %265 {offsets = [1, 0], sizes = [1, 32], strides = [1, 1]} : vector<16x32xf32> to vector<1x32xf32>
    %268 = vector.extract_strided_slice %265 {offsets = [2, 0], sizes = [1, 32], strides = [1, 1]} : vector<16x32xf32> to vector<1x32xf32>
    %269 = vector.extract_strided_slice %265 {offsets = [3, 0], sizes = [1, 32], strides = [1, 1]} : vector<16x32xf32> to vector<1x32xf32>
    %270 = vector.extract_strided_slice %265 {offsets = [4, 0], sizes = [1, 32], strides = [1, 1]} : vector<16x32xf32> to vector<1x32xf32>
    %271 = vector.extract_strided_slice %265 {offsets = [5, 0], sizes = [1, 32], strides = [1, 1]} : vector<16x32xf32> to vector<1x32xf32>
    %272 = vector.extract_strided_slice %265 {offsets = [6, 0], sizes = [1, 32], strides = [1, 1]} : vector<16x32xf32> to vector<1x32xf32>
    %273 = vector.extract_strided_slice %265 {offsets = [7, 0], sizes = [1, 32], strides = [1, 1]} : vector<16x32xf32> to vector<1x32xf32>
    %274 = vector.extract_strided_slice %265 {offsets = [8, 0], sizes = [1, 32], strides = [1, 1]} : vector<16x32xf32> to vector<1x32xf32>
    %c0_151 = arith.constant 0 : index
    %c6 = arith.constant 6 : index
    %c0_152 = arith.constant 0 : index
    %275 = vector.load %arg2[%c0_151, %c6, %c0_152] : memref<2x30x32xf32, #tpu.memory_space<vmem>>, vector<1x8x32xf32>
    %276 = vector.shape_cast %275 : vector<1x8x32xf32> to vector<8x32xf32>
    %c0_153 = arith.constant 0 : index
    %c8 = arith.constant 8 : index
    %c0_154 = arith.constant 0 : index
    %277 = vector.load %arg7[%c0_153, %c8, %c0_154] : memref<2x32x32xf32, #tpu.memory_space<vmem>>, vector<1x8x32xf32>
    %278 = vector.shape_cast %277 : vector<1x8x32xf32> to vector<8x32xf32>
    %279 = vector.shape_cast %276 : vector<8x32xf32> to vector<1x8x32xf32>
    tpu.vector_store %arg7[%c0_153, %c8, %c0_154], %279 {strides = array<i32>} : memref<2x32x32xf32, #tpu.memory_space<vmem>>, vector<1x8x32xf32>,
    %c0_155 = arith.constant 0 : index
    %c24 = arith.constant 24 : index
    %c0_156 = arith.constant 0 : index
    %280 = vector.load %arg7[%c0_155, %c24, %c0_156] : memref<2x32x32xf32, #tpu.memory_space<vmem>>, vector<1x8x32xf32>
    %281 = vector.shape_cast %280 : vector<1x8x32xf32> to vector<8x32xf32>
    %c0_157 = arith.constant 0 : index
    %c6_158 = arith.constant 6 : index
    %c0_159 = arith.constant 0 : index
    %282 = vector.load %arg6[%c0_157, %c6_158, %c0_159] : memref<2x30x32xf32, #tpu.memory_space<vmem>>, vector<1x8x32xf32>
    %283 = vector.shape_cast %282 : vector<1x8x32xf32> to vector<8x32xf32>
    %284 = vector.shape_cast %281 : vector<8x32xf32> to vector<1x8x32xf32>
    tpu.vector_store %arg6[%c0_157, %c6_158, %c0_159], %284 {strides = array<i32>} : memref<2x30x32xf32, #tpu.memory_space<vmem>>, vector<1x8x32xf32>,
    %c0_160 = arith.constant 0 : index
    %c8_161 = arith.constant 8 : index
    %c0_162 = arith.constant 0 : index
    %285 = vector.load %arg7[%c0_160, %c8_161, %c0_162] : memref<2x32x32xf32, #tpu.memory_space<vmem>>, vector<1x16x32xf32>
    %286 = vector.shape_cast %285 : vector<1x16x32xf32> to vector<16x32xf32>
    %c0_163 = arith.constant 0 : index
    %c12_164 = arith.constant 12 : index
    %c0_165 = arith.constant 0 : index
    %287 = vector.load %arg7[%c0_163, %c12_164, %c0_165] : memref<2x32x32xf32, #tpu.memory_space<vmem>>, vector<1x16x32xf32>
    %288 = vector.shape_cast %287 : vector<1x16x32xf32> to vector<16x32xf32>
    %c0_166 = arith.constant 0 : index
    %c16_167 = arith.constant 16 : index
    %c0_168 = arith.constant 0 : index
    %289 = vector.load %arg7[%c0_166, %c16_167, %c0_168] : memref<2x32x32xf32, #tpu.memory_space<vmem>>, vector<1x16x32xf32>
    %290 = vector.shape_cast %289 : vector<1x16x32xf32> to vector<16x32xf32>
    %291 = vector.broadcast %266 : vector<1x32xf32> to vector<16x32xf32>
    %292 = arith.mulf %286, %291 : vector<16x32xf32>
    %293 = vector.broadcast %267 : vector<1x32xf32> to vector<16x32xf32>
    %294 = arith.mulf %288, %293 : vector<16x32xf32>
    %295 = arith.addf %292, %294 : vector<16x32xf32>
    %296 = vector.broadcast %268 : vector<1x32xf32> to vector<16x32xf32>
    %297 = arith.mulf %290, %296 : vector<16x32xf32>
    %298 = arith.addf %295, %297 : vector<16x32xf32>
    %299 = vector.broadcast %269 : vector<1x32xf32> to vector<16x32xf32>
    %300 = arith.addf %298, %299 : vector<16x32xf32>
    %c1_169 = arith.constant 1 : index
    %c6_170 = arith.constant 6 : index
    %c0_171 = arith.constant 0 : index
    %301 = vector.load %arg2[%c1_169, %c6_170, %c0_171] : memref<2x30x32xf32, #tpu.memory_space<vmem>>, vector<1x8x32xf32>
    %302 = vector.shape_cast %301 : vector<1x8x32xf32> to vector<8x32xf32>
    %c1_172 = arith.constant 1 : index
    %c8_173 = arith.constant 8 : index
    %c0_174 = arith.constant 0 : index
    %303 = vector.load %arg7[%c1_172, %c8_173, %c0_174] : memref<2x32x32xf32, #tpu.memory_space<vmem>>, vector<1x8x32xf32>
    %304 = vector.shape_cast %303 : vector<1x8x32xf32> to vector<8x32xf32>
    %305 = vector.shape_cast %302 : vector<8x32xf32> to vector<1x8x32xf32>
    tpu.vector_store %arg7[%c1_172, %c8_173, %c0_174], %305 {strides = array<i32>} : memref<2x32x32xf32, #tpu.memory_space<vmem>>, vector<1x8x32xf32>,
    %c1_175 = arith.constant 1 : index
    %c24_176 = arith.constant 24 : index
    %c0_177 = arith.constant 0 : index
    %306 = vector.load %arg7[%c1_175, %c24_176, %c0_177] : memref<2x32x32xf32, #tpu.memory_space<vmem>>, vector<1x8x32xf32>
    %307 = vector.shape_cast %306 : vector<1x8x32xf32> to vector<8x32xf32>
    %c1_178 = arith.constant 1 : index
    %c6_179 = arith.constant 6 : index
    %c0_180 = arith.constant 0 : index
    %308 = vector.load %arg6[%c1_178, %c6_179, %c0_180] : memref<2x30x32xf32, #tpu.memory_space<vmem>>, vector<1x8x32xf32>
    %309 = vector.shape_cast %308 : vector<1x8x32xf32> to vector<8x32xf32>
    %310 = vector.shape_cast %307 : vector<8x32xf32> to vector<1x8x32xf32>
    tpu.vector_store %arg6[%c1_178, %c6_179, %c0_180], %310 {strides = array<i32>} : memref<2x30x32xf32, #tpu.memory_space<vmem>>, vector<1x8x32xf32>,
    %c1_181 = arith.constant 1 : index
    %c8_182 = arith.constant 8 : index
    %c0_183 = arith.constant 0 : index
    %311 = vector.load %arg7[%c1_181, %c8_182, %c0_183] : memref<2x32x32xf32, #tpu.memory_space<vmem>>, vector<1x16x32xf32>
    %312 = vector.shape_cast %311 : vector<1x16x32xf32> to vector<16x32xf32>
    %c1_184 = arith.constant 1 : index
    %c12_185 = arith.constant 12 : index
    %c0_186 = arith.constant 0 : index
    %313 = vector.load %arg7[%c1_184, %c12_185, %c0_186] : memref<2x32x32xf32, #tpu.memory_space<vmem>>, vector<1x16x32xf32>
    %314 = vector.shape_cast %313 : vector<1x16x32xf32> to vector<16x32xf32>
    %c1_187 = arith.constant 1 : index
    %c16_188 = arith.constant 16 : index
    %c0_189 = arith.constant 0 : index
    %315 = vector.load %arg7[%c1_187, %c16_188, %c0_189] : memref<2x32x32xf32, #tpu.memory_space<vmem>>, vector<1x16x32xf32>
    %316 = vector.shape_cast %315 : vector<1x16x32xf32> to vector<16x32xf32>
    %317 = vector.broadcast %266 : vector<1x32xf32> to vector<16x32xf32>
    %318 = arith.mulf %312, %317 : vector<16x32xf32>
    %319 = vector.broadcast %267 : vector<1x32xf32> to vector<16x32xf32>
    %320 = arith.mulf %314, %319 : vector<16x32xf32>
    %321 = arith.addf %318, %320 : vector<16x32xf32>
    %322 = vector.broadcast %268 : vector<1x32xf32> to vector<16x32xf32>
    %323 = arith.mulf %316, %322 : vector<16x32xf32>
    %324 = arith.addf %321, %323 : vector<16x32xf32>
    %325 = vector.broadcast %269 : vector<1x32xf32> to vector<16x32xf32>
    %326 = arith.addf %324, %325 : vector<16x32xf32>
    %327 = tpu.concatenate %300, %326 in 0 : vector<16x32xf32>, vector<16x32xf32> -> vector<32x32xf32>
    %cst_190 = arith.constant dense<0.000000e+00> : vector<32xf32>
    %328 = vector.multi_reduction <add>, %327, %cst_190 [1] : vector<32x32xf32> to vector<32xf32>
    %329 = vector.shape_cast %328 : vector<32xf32> to vector<32x1xf32>
    %cst_191 = arith.constant 3.125000e-02 : f32
    %330 = vector.broadcast %cst_191 : f32 to vector<32x1xf32>
    %331 = arith.mulf %329, %330 : vector<32x1xf32>
    %332 = vector.broadcast %331 : vector<32x1xf32> to vector<32x32xf32>
    %333 = arith.subf %327, %332 : vector<32x32xf32>
    %334 = arith.mulf %333, %333 : vector<32x32xf32>
    %cst_192 = arith.constant dense<0.000000e+00> : vector<32xf32>
    %335 = vector.multi_reduction <add>, %334, %cst_192 [1] : vector<32x32xf32> to vector<32xf32>
    %336 = vector.shape_cast %335 : vector<32xf32> to vector<32x1xf32>
    %cst_193 = arith.constant 3.125000e-02 : f32
    %337 = vector.broadcast %cst_193 : f32 to vector<32x1xf32>
    %338 = arith.mulf %336, %337 : vector<32x1xf32>
    %cst_194 = arith.constant 9.99999974E-6 : f32
    %339 = vector.broadcast %cst_194 : f32 to vector<32x1xf32>
    %340 = arith.addf %338, %339 : vector<32x1xf32>
    %341 = math.rsqrt %340 : vector<32x1xf32>
    %342 = vector.broadcast %341 : vector<32x1xf32> to vector<32x32xf32>
    %343 = arith.mulf %333, %342 : vector<32x32xf32>
    %344 = vector.broadcast %270 : vector<1x32xf32> to vector<32x32xf32>
    %345 = arith.mulf %343, %344 : vector<32x32xf32>
    %346 = vector.broadcast %271 : vector<1x32xf32> to vector<32x32xf32>
    %347 = arith.addf %345, %346 : vector<32x32xf32>
    %cst_195 = arith.constant 0.000000e+00 : f32
    %348 = vector.broadcast %cst_195 : f32 to vector<32x32xf32>
    %349 = arith.maximumf %347, %348 : vector<32x32xf32>
    %c2_196 = arith.constant 2 : index
    %c0_197 = arith.constant 0 : index
    %c0_198 = arith.constant 0 : index
    %350 = vector.load %arg4[%c2_196, %c0_197, %c0_198] : memref<4x32x32xf32, #tpu.memory_space<vmem>>, vector<1x32x32xf32>
    %351 = vector.shape_cast %350 : vector<1x32x32xf32> to vector<32x32xf32>
    %cst_199 = arith.constant dense<0.000000e+00> : vector<32x32xf32>
    %352 = tpu.matmul %349, %351, %cst_199 {dimension_numbers = #tpu.dot_dimension_numbers<[1], [0], [0], [1], [0, 0, 1, 1], [], []>} : vector<32x32xf32>, vector<32x32xf32>, vector<32x32xf32> -> vector<32x32xf32>
    %353 = vector.broadcast %272 : vector<1x32xf32> to vector<32x32xf32>
    %354 = arith.addf %352, %353 : vector<32x32xf32>
    %cst_200 = arith.constant dense<0.000000e+00> : vector<32xf32>
    %355 = vector.multi_reduction <add>, %354, %cst_200 [1] : vector<32x32xf32> to vector<32xf32>
    %356 = vector.shape_cast %355 : vector<32xf32> to vector<32x1xf32>
    %cst_201 = arith.constant 3.125000e-02 : f32
    %357 = vector.broadcast %cst_201 : f32 to vector<32x1xf32>
    %358 = arith.mulf %356, %357 : vector<32x1xf32>
    %359 = vector.broadcast %358 : vector<32x1xf32> to vector<32x32xf32>
    %360 = arith.subf %354, %359 : vector<32x32xf32>
    %361 = arith.mulf %360, %360 : vector<32x32xf32>
    %cst_202 = arith.constant dense<0.000000e+00> : vector<32xf32>
    %362 = vector.multi_reduction <add>, %361, %cst_202 [1] : vector<32x32xf32> to vector<32xf32>
    %363 = vector.shape_cast %362 : vector<32xf32> to vector<32x1xf32>
    %cst_203 = arith.constant 3.125000e-02 : f32
    %364 = vector.broadcast %cst_203 : f32 to vector<32x1xf32>
    %365 = arith.mulf %363, %364 : vector<32x1xf32>
    %cst_204 = arith.constant 9.99999974E-6 : f32
    %366 = vector.broadcast %cst_204 : f32 to vector<32x1xf32>
    %367 = arith.addf %365, %366 : vector<32x1xf32>
    %368 = math.rsqrt %367 : vector<32x1xf32>
    %369 = vector.broadcast %368 : vector<32x1xf32> to vector<32x32xf32>
    %370 = arith.mulf %360, %369 : vector<32x32xf32>
    %371 = vector.broadcast %273 : vector<1x32xf32> to vector<32x32xf32>
    %372 = arith.mulf %370, %371 : vector<32x32xf32>
    %373 = vector.broadcast %274 : vector<1x32xf32> to vector<32x32xf32>
    %374 = arith.addf %372, %373 : vector<32x32xf32>
    %cst_205 = arith.constant 0.000000e+00 : f32
    %375 = vector.broadcast %cst_205 : f32 to vector<32x32xf32>
    %376 = arith.maximumf %374, %375 : vector<32x32xf32>
    %c0_206 = arith.constant 0 : index
    %c16_207 = arith.constant 16 : index
    %c0_208 = arith.constant 0 : index
    %377 = vector.load %arg7[%c0_206, %c16_207, %c0_208] : memref<2x32x32xf32, #tpu.memory_space<vmem>>, vector<1x16x32xf32>
    %378 = vector.shape_cast %377 : vector<1x16x32xf32> to vector<16x32xf32>
    %379 = vector.extract_strided_slice %376 {offsets = [0, 0], sizes = [16, 32], strides = [1, 1]} : vector<32x32xf32> to vector<16x32xf32>
    %380 = arith.addf %378, %379 : vector<16x32xf32>
    %c0_209 = arith.constant 0 : index
    %c16_210 = arith.constant 16 : index
    %c0_211 = arith.constant 0 : index
    %381 = vector.load %arg7[%c0_209, %c16_210, %c0_211] : memref<2x32x32xf32, #tpu.memory_space<vmem>>, vector<1x16x32xf32>
    %382 = vector.shape_cast %381 : vector<1x16x32xf32> to vector<16x32xf32>
    %383 = vector.shape_cast %380 : vector<16x32xf32> to vector<1x16x32xf32>
    tpu.vector_store %arg7[%c0_209, %c16_210, %c0_211], %383 {strides = array<i32>} : memref<2x32x32xf32, #tpu.memory_space<vmem>>, vector<1x16x32xf32>,
    %c1_212 = arith.constant 1 : index
    %c16_213 = arith.constant 16 : index
    %c0_214 = arith.constant 0 : index
    %384 = vector.load %arg7[%c1_212, %c16_213, %c0_214] : memref<2x32x32xf32, #tpu.memory_space<vmem>>, vector<1x16x32xf32>
    %385 = vector.shape_cast %384 : vector<1x16x32xf32> to vector<16x32xf32>
    %386 = vector.extract_strided_slice %376 {offsets = [16, 0], sizes = [16, 32], strides = [1, 1]} : vector<32x32xf32> to vector<16x32xf32>
    %387 = arith.addf %385, %386 : vector<16x32xf32>
    %c1_215 = arith.constant 1 : index
    %c16_216 = arith.constant 16 : index
    %c0_217 = arith.constant 0 : index
    %388 = vector.load %arg7[%c1_215, %c16_216, %c0_217] : memref<2x32x32xf32, #tpu.memory_space<vmem>>, vector<1x16x32xf32>
    %389 = vector.shape_cast %388 : vector<1x16x32xf32> to vector<16x32xf32>
    %390 = vector.shape_cast %387 : vector<16x32xf32> to vector<1x16x32xf32>
    tpu.vector_store %arg7[%c1_215, %c16_216, %c0_217], %390 {strides = array<i32>} : memref<2x32x32xf32, #tpu.memory_space<vmem>>, vector<1x16x32xf32>,
    %c3 = arith.constant 3 : index
    %c0_218 = arith.constant 0 : index
    %c0_219 = arith.constant 0 : index
    %391 = vector.load %arg3[%c3, %c0_218, %c0_219] : memref<4x16x32xf32, #tpu.memory_space<vmem>>, vector<1x16x32xf32>
    %392 = vector.shape_cast %391 : vector<1x16x32xf32> to vector<16x32xf32>
    %393 = vector.extract_strided_slice %392 {offsets = [0, 0], sizes = [1, 32], strides = [1, 1]} : vector<16x32xf32> to vector<1x32xf32>
    %394 = vector.extract_strided_slice %392 {offsets = [1, 0], sizes = [1, 32], strides = [1, 1]} : vector<16x32xf32> to vector<1x32xf32>
    %395 = vector.extract_strided_slice %392 {offsets = [2, 0], sizes = [1, 32], strides = [1, 1]} : vector<16x32xf32> to vector<1x32xf32>
    %396 = vector.extract_strided_slice %392 {offsets = [3, 0], sizes = [1, 32], strides = [1, 1]} : vector<16x32xf32> to vector<1x32xf32>
    %397 = vector.extract_strided_slice %392 {offsets = [4, 0], sizes = [1, 32], strides = [1, 1]} : vector<16x32xf32> to vector<1x32xf32>
    %398 = vector.extract_strided_slice %392 {offsets = [5, 0], sizes = [1, 32], strides = [1, 1]} : vector<16x32xf32> to vector<1x32xf32>
    %399 = vector.extract_strided_slice %392 {offsets = [6, 0], sizes = [1, 32], strides = [1, 1]} : vector<16x32xf32> to vector<1x32xf32>
    %400 = vector.extract_strided_slice %392 {offsets = [7, 0], sizes = [1, 32], strides = [1, 1]} : vector<16x32xf32> to vector<1x32xf32>
    %401 = vector.extract_strided_slice %392 {offsets = [8, 0], sizes = [1, 32], strides = [1, 1]} : vector<16x32xf32> to vector<1x32xf32>
    %c0_220 = arith.constant 0 : index
    %c14_221 = arith.constant 14 : index
    %c0_222 = arith.constant 0 : index
    %402 = vector.load %arg2[%c0_220, %c14_221, %c0_222] : memref<2x30x32xf32, #tpu.memory_space<vmem>>, vector<1x16x32xf32>
    %403 = vector.shape_cast %402 : vector<1x16x32xf32> to vector<16x32xf32>
    %c0_223 = arith.constant 0 : index
    %c0_224 = arith.constant 0 : index
    %c0_225 = arith.constant 0 : index
    %404 = vector.load %arg7[%c0_223, %c0_224, %c0_225] : memref<2x32x32xf32, #tpu.memory_space<vmem>>, vector<1x16x32xf32>
    %405 = vector.shape_cast %404 : vector<1x16x32xf32> to vector<16x32xf32>
    %406 = vector.shape_cast %403 : vector<16x32xf32> to vector<1x16x32xf32>
    tpu.vector_store %arg7[%c0_223, %c0_224, %c0_225], %406 {strides = array<i32>} : memref<2x32x32xf32, #tpu.memory_space<vmem>>, vector<1x16x32xf32>,
    %c0_226 = arith.constant 0 : index
    %c16_227 = arith.constant 16 : index
    %c0_228 = arith.constant 0 : index
    %407 = vector.load %arg7[%c0_226, %c16_227, %c0_228] : memref<2x32x32xf32, #tpu.memory_space<vmem>>, vector<1x16x32xf32>
    %408 = vector.shape_cast %407 : vector<1x16x32xf32> to vector<16x32xf32>
    %c0_229 = arith.constant 0 : index
    %c14_230 = arith.constant 14 : index
    %c0_231 = arith.constant 0 : index
    %409 = vector.load %arg6[%c0_229, %c14_230, %c0_231] : memref<2x30x32xf32, #tpu.memory_space<vmem>>, vector<1x16x32xf32>
    %410 = vector.shape_cast %409 : vector<1x16x32xf32> to vector<16x32xf32>
    %411 = vector.shape_cast %408 : vector<16x32xf32> to vector<1x16x32xf32>
    tpu.vector_store %arg6[%c0_229, %c14_230, %c0_231], %411 {strides = array<i32>} : memref<2x30x32xf32, #tpu.memory_space<vmem>>, vector<1x16x32xf32>,
    %c0_232 = arith.constant 0 : index
    %c0_233 = arith.constant 0 : index
    %c0_234 = arith.constant 0 : index
    %412 = vector.load %arg7[%c0_232, %c0_233, %c0_234] : memref<2x32x32xf32, #tpu.memory_space<vmem>>, vector<1x16x32xf32>
    %413 = vector.shape_cast %412 : vector<1x16x32xf32> to vector<16x32xf32>
    %c0_235 = arith.constant 0 : index
    %c8_236 = arith.constant 8 : index
    %c0_237 = arith.constant 0 : index
    %414 = vector.load %arg7[%c0_235, %c8_236, %c0_237] : memref<2x32x32xf32, #tpu.memory_space<vmem>>, vector<1x16x32xf32>
    %415 = vector.shape_cast %414 : vector<1x16x32xf32> to vector<16x32xf32>
    %c0_238 = arith.constant 0 : index
    %c16_239 = arith.constant 16 : index
    %c0_240 = arith.constant 0 : index
    %416 = vector.load %arg7[%c0_238, %c16_239, %c0_240] : memref<2x32x32xf32, #tpu.memory_space<vmem>>, vector<1x16x32xf32>
    %417 = vector.shape_cast %416 : vector<1x16x32xf32> to vector<16x32xf32>
    %418 = vector.broadcast %393 : vector<1x32xf32> to vector<16x32xf32>
    %419 = arith.mulf %413, %418 : vector<16x32xf32>
    %420 = vector.broadcast %394 : vector<1x32xf32> to vector<16x32xf32>
    %421 = arith.mulf %415, %420 : vector<16x32xf32>
    %422 = arith.addf %419, %421 : vector<16x32xf32>
    %423 = vector.broadcast %395 : vector<1x32xf32> to vector<16x32xf32>
    %424 = arith.mulf %417, %423 : vector<16x32xf32>
    %425 = arith.addf %422, %424 : vector<16x32xf32>
    %426 = vector.broadcast %396 : vector<1x32xf32> to vector<16x32xf32>
    %427 = arith.addf %425, %426 : vector<16x32xf32>
    %c1_241 = arith.constant 1 : index
    %c14_242 = arith.constant 14 : index
    %c0_243 = arith.constant 0 : index
    %428 = vector.load %arg2[%c1_241, %c14_242, %c0_243] : memref<2x30x32xf32, #tpu.memory_space<vmem>>, vector<1x16x32xf32>
    %429 = vector.shape_cast %428 : vector<1x16x32xf32> to vector<16x32xf32>
    %c1_244 = arith.constant 1 : index
    %c0_245 = arith.constant 0 : index
    %c0_246 = arith.constant 0 : index
    %430 = vector.load %arg7[%c1_244, %c0_245, %c0_246] : memref<2x32x32xf32, #tpu.memory_space<vmem>>, vector<1x16x32xf32>
    %431 = vector.shape_cast %430 : vector<1x16x32xf32> to vector<16x32xf32>
    %432 = vector.shape_cast %429 : vector<16x32xf32> to vector<1x16x32xf32>
    tpu.vector_store %arg7[%c1_244, %c0_245, %c0_246], %432 {strides = array<i32>} : memref<2x32x32xf32, #tpu.memory_space<vmem>>, vector<1x16x32xf32>,
    %c1_247 = arith.constant 1 : index
    %c16_248 = arith.constant 16 : index
    %c0_249 = arith.constant 0 : index
    %433 = vector.load %arg7[%c1_247, %c16_248, %c0_249] : memref<2x32x32xf32, #tpu.memory_space<vmem>>, vector<1x16x32xf32>
    %434 = vector.shape_cast %433 : vector<1x16x32xf32> to vector<16x32xf32>
    %c1_250 = arith.constant 1 : index
    %c14_251 = arith.constant 14 : index
    %c0_252 = arith.constant 0 : index
    %435 = vector.load %arg6[%c1_250, %c14_251, %c0_252] : memref<2x30x32xf32, #tpu.memory_space<vmem>>, vector<1x16x32xf32>
    %436 = vector.shape_cast %435 : vector<1x16x32xf32> to vector<16x32xf32>
    %437 = vector.shape_cast %434 : vector<16x32xf32> to vector<1x16x32xf32>
    tpu.vector_store %arg6[%c1_250, %c14_251, %c0_252], %437 {strides = array<i32>} : memref<2x30x32xf32, #tpu.memory_space<vmem>>, vector<1x16x32xf32>,
    %c1_253 = arith.constant 1 : index
    %c0_254 = arith.constant 0 : index
    %c0_255 = arith.constant 0 : index
    %438 = vector.load %arg7[%c1_253, %c0_254, %c0_255] : memref<2x32x32xf32, #tpu.memory_space<vmem>>, vector<1x16x32xf32>
    %439 = vector.shape_cast %438 : vector<1x16x32xf32> to vector<16x32xf32>
    %c1_256 = arith.constant 1 : index
    %c8_257 = arith.constant 8 : index
    %c0_258 = arith.constant 0 : index
    %440 = vector.load %arg7[%c1_256, %c8_257, %c0_258] : memref<2x32x32xf32, #tpu.memory_space<vmem>>, vector<1x16x32xf32>
    %441 = vector.shape_cast %440 : vector<1x16x32xf32> to vector<16x32xf32>
    %c1_259 = arith.constant 1 : index
    %c16_260 = arith.constant 16 : index
    %c0_261 = arith.constant 0 : index
    %442 = vector.load %arg7[%c1_259, %c16_260, %c0_261] : memref<2x32x32xf32, #tpu.memory_space<vmem>>, vector<1x16x32xf32>
    %443 = vector.shape_cast %442 : vector<1x16x32xf32> to vector<16x32xf32>
    %444 = vector.broadcast %393 : vector<1x32xf32> to vector<16x32xf32>
    %445 = arith.mulf %439, %444 : vector<16x32xf32>
    %446 = vector.broadcast %394 : vector<1x32xf32> to vector<16x32xf32>
    %447 = arith.mulf %441, %446 : vector<16x32xf32>
    %448 = arith.addf %445, %447 : vector<16x32xf32>
    %449 = vector.broadcast %395 : vector<1x32xf32> to vector<16x32xf32>
    %450 = arith.mulf %443, %449 : vector<16x32xf32>
    %451 = arith.addf %448, %450 : vector<16x32xf32>
    %452 = vector.broadcast %396 : vector<1x32xf32> to vector<16x32xf32>
    %453 = arith.addf %451, %452 : vector<16x32xf32>
    %454 = tpu.concatenate %427, %453 in 0 : vector<16x32xf32>, vector<16x32xf32> -> vector<32x32xf32>
    %cst_262 = arith.constant dense<0.000000e+00> : vector<32xf32>
    %455 = vector.multi_reduction <add>, %454, %cst_262 [1] : vector<32x32xf32> to vector<32xf32>
    %456 = vector.shape_cast %455 : vector<32xf32> to vector<32x1xf32>
    %cst_263 = arith.constant 3.125000e-02 : f32
    %457 = vector.broadcast %cst_263 : f32 to vector<32x1xf32>
    %458 = arith.mulf %456, %457 : vector<32x1xf32>
    %459 = vector.broadcast %458 : vector<32x1xf32> to vector<32x32xf32>
    %460 = arith.subf %454, %459 : vector<32x32xf32>
    %461 = arith.mulf %460, %460 : vector<32x32xf32>
    %cst_264 = arith.constant dense<0.000000e+00> : vector<32xf32>
    %462 = vector.multi_reduction <add>, %461, %cst_264 [1] : vector<32x32xf32> to vector<32xf32>
    %463 = vector.shape_cast %462 : vector<32xf32> to vector<32x1xf32>
    %cst_265 = arith.constant 3.125000e-02 : f32
    %464 = vector.broadcast %cst_265 : f32 to vector<32x1xf32>
    %465 = arith.mulf %463, %464 : vector<32x1xf32>
    %cst_266 = arith.constant 9.99999974E-6 : f32
    %466 = vector.broadcast %cst_266 : f32 to vector<32x1xf32>
    %467 = arith.addf %465, %466 : vector<32x1xf32>
    %468 = math.rsqrt %467 : vector<32x1xf32>
    %469 = vector.broadcast %468 : vector<32x1xf32> to vector<32x32xf32>
    %470 = arith.mulf %460, %469 : vector<32x32xf32>
    %471 = vector.broadcast %397 : vector<1x32xf32> to vector<32x32xf32>
    %472 = arith.mulf %470, %471 : vector<32x32xf32>
    %473 = vector.broadcast %398 : vector<1x32xf32> to vector<32x32xf32>
    %474 = arith.addf %472, %473 : vector<32x32xf32>
    %cst_267 = arith.constant 0.000000e+00 : f32
    %475 = vector.broadcast %cst_267 : f32 to vector<32x32xf32>
    %476 = arith.maximumf %474, %475 : vector<32x32xf32>
    %c3_268 = arith.constant 3 : index
    %c0_269 = arith.constant 0 : index
    %c0_270 = arith.constant 0 : index
    %477 = vector.load %arg4[%c3_268, %c0_269, %c0_270] : memref<4x32x32xf32, #tpu.memory_space<vmem>>, vector<1x32x32xf32>
    %478 = vector.shape_cast %477 : vector<1x32x32xf32> to vector<32x32xf32>
    %cst_271 = arith.constant dense<0.000000e+00> : vector<32x32xf32>
    %479 = tpu.matmul %476, %478, %cst_271 {dimension_numbers = #tpu.dot_dimension_numbers<[1], [0], [0], [1], [0, 0, 1, 1], [], []>} : vector<32x32xf32>, vector<32x32xf32>, vector<32x32xf32> -> vector<32x32xf32>
    %480 = vector.broadcast %399 : vector<1x32xf32> to vector<32x32xf32>
    %481 = arith.addf %479, %480 : vector<32x32xf32>
    %cst_272 = arith.constant dense<0.000000e+00> : vector<32xf32>
    %482 = vector.multi_reduction <add>, %481, %cst_272 [1] : vector<32x32xf32> to vector<32xf32>
    %483 = vector.shape_cast %482 : vector<32xf32> to vector<32x1xf32>
    %cst_273 = arith.constant 3.125000e-02 : f32
    %484 = vector.broadcast %cst_273 : f32 to vector<32x1xf32>
    %485 = arith.mulf %483, %484 : vector<32x1xf32>
    %486 = vector.broadcast %485 : vector<32x1xf32> to vector<32x32xf32>
    %487 = arith.subf %481, %486 : vector<32x32xf32>
    %488 = arith.mulf %487, %487 : vector<32x32xf32>
    %cst_274 = arith.constant dense<0.000000e+00> : vector<32xf32>
    %489 = vector.multi_reduction <add>, %488, %cst_274 [1] : vector<32x32xf32> to vector<32xf32>
    %490 = vector.shape_cast %489 : vector<32xf32> to vector<32x1xf32>
    %cst_275 = arith.constant 3.125000e-02 : f32
    %491 = vector.broadcast %cst_275 : f32 to vector<32x1xf32>
    %492 = arith.mulf %490, %491 : vector<32x1xf32>
    %cst_276 = arith.constant 9.99999974E-6 : f32
    %493 = vector.broadcast %cst_276 : f32 to vector<32x1xf32>
    %494 = arith.addf %492, %493 : vector<32x1xf32>
    %495 = math.rsqrt %494 : vector<32x1xf32>
    %496 = vector.broadcast %495 : vector<32x1xf32> to vector<32x32xf32>
    %497 = arith.mulf %487, %496 : vector<32x32xf32>
    %498 = vector.broadcast %400 : vector<1x32xf32> to vector<32x32xf32>
    %499 = arith.mulf %497, %498 : vector<32x32xf32>
    %500 = vector.broadcast %401 : vector<1x32xf32> to vector<32x32xf32>
    %501 = arith.addf %499, %500 : vector<32x32xf32>
    %cst_277 = arith.constant 0.000000e+00 : f32
    %502 = vector.broadcast %cst_277 : f32 to vector<32x32xf32>
    %503 = arith.maximumf %501, %502 : vector<32x32xf32>
    %c0_278 = arith.constant 0 : index
    %c16_279 = arith.constant 16 : index
    %c0_280 = arith.constant 0 : index
    %504 = vector.load %arg7[%c0_278, %c16_279, %c0_280] : memref<2x32x32xf32, #tpu.memory_space<vmem>>, vector<1x16x32xf32>
    %505 = vector.shape_cast %504 : vector<1x16x32xf32> to vector<16x32xf32>
    %506 = vector.extract_strided_slice %503 {offsets = [0, 0], sizes = [16, 32], strides = [1, 1]} : vector<32x32xf32> to vector<16x32xf32>
    %507 = arith.addf %505, %506 : vector<16x32xf32>
    %c0_281 = arith.constant 0 : index
    %c16_282 = arith.constant 16 : index
    %c0_283 = arith.constant 0 : index
    %508 = vector.load %arg7[%c0_281, %c16_282, %c0_283] : memref<2x32x32xf32, #tpu.memory_space<vmem>>, vector<1x16x32xf32>
    %509 = vector.shape_cast %508 : vector<1x16x32xf32> to vector<16x32xf32>
    %510 = vector.shape_cast %507 : vector<16x32xf32> to vector<1x16x32xf32>
    tpu.vector_store %arg7[%c0_281, %c16_282, %c0_283], %510 {strides = array<i32>} : memref<2x32x32xf32, #tpu.memory_space<vmem>>, vector<1x16x32xf32>,
    %c1_284 = arith.constant 1 : index
    %c16_285 = arith.constant 16 : index
    %c0_286 = arith.constant 0 : index
    %511 = vector.load %arg7[%c1_284, %c16_285, %c0_286] : memref<2x32x32xf32, #tpu.memory_space<vmem>>, vector<1x16x32xf32>
    %512 = vector.shape_cast %511 : vector<1x16x32xf32> to vector<16x32xf32>
    %513 = vector.extract_strided_slice %503 {offsets = [16, 0], sizes = [16, 32], strides = [1, 1]} : vector<32x32xf32> to vector<16x32xf32>
    %514 = arith.addf %512, %513 : vector<16x32xf32>
    %c1_287 = arith.constant 1 : index
    %c16_288 = arith.constant 16 : index
    %c0_289 = arith.constant 0 : index
    %515 = vector.load %arg7[%c1_287, %c16_288, %c0_289] : memref<2x32x32xf32, #tpu.memory_space<vmem>>, vector<1x16x32xf32>
    %516 = vector.shape_cast %515 : vector<1x16x32xf32> to vector<16x32xf32>
    %517 = vector.shape_cast %514 : vector<16x32xf32> to vector<1x16x32xf32>
    tpu.vector_store %arg7[%c1_287, %c16_288, %c0_289], %517 {strides = array<i32>} : memref<2x32x32xf32, #tpu.memory_space<vmem>>, vector<1x16x32xf32>,
    %c0_290 = arith.constant 0 : index
    %c16_291 = arith.constant 16 : index
    %c0_292 = arith.constant 0 : index
    %518 = vector.load %arg7[%c0_290, %c16_291, %c0_292] : memref<2x32x32xf32, #tpu.memory_space<vmem>>, vector<1x16x32xf32>
    %519 = vector.shape_cast %518 : vector<1x16x32xf32> to vector<16x32xf32>
    %c0_293 = arith.constant 0 : index
    %c0_294 = arith.constant 0 : index
    %c0_295 = arith.constant 0 : index
    %520 = vector.load %arg5[%c0_293, %c0_294, %c0_295] : memref<2x16x32xf32, #tpu.memory_space<vmem>>, vector<1x16x32xf32>
    %521 = vector.shape_cast %520 : vector<1x16x32xf32> to vector<16x32xf32>
    %522 = vector.shape_cast %519 : vector<16x32xf32> to vector<1x16x32xf32>
    tpu.vector_store %arg5[%c0_293, %c0_294, %c0_295], %522 {strides = array<i32>} : memref<2x16x32xf32, #tpu.memory_space<vmem>>, vector<1x16x32xf32>,
    %c1_296 = arith.constant 1 : index
    %c16_297 = arith.constant 16 : index
    %c0_298 = arith.constant 0 : index
    %523 = vector.load %arg7[%c1_296, %c16_297, %c0_298] : memref<2x32x32xf32, #tpu.memory_space<vmem>>, vector<1x16x32xf32>
    %524 = vector.shape_cast %523 : vector<1x16x32xf32> to vector<16x32xf32>
    %c1_299 = arith.constant 1 : index
    %c0_300 = arith.constant 0 : index
    %c0_301 = arith.constant 0 : index
    %525 = vector.load %arg5[%c1_299, %c0_300, %c0_301] : memref<2x16x32xf32, #tpu.memory_space<vmem>>, vector<1x16x32xf32>
    %526 = vector.shape_cast %525 : vector<1x16x32xf32> to vector<16x32xf32>
    %527 = vector.shape_cast %524 : vector<16x32xf32> to vector<1x16x32xf32>
    tpu.vector_store %arg5[%c1_299, %c0_300, %c0_301], %527 {strides = array<i32>} : memref<2x16x32xf32, #tpu.memory_space<vmem>>, vector<1x16x32xf32>,
    return
  }
  func.func @transform_0(%arg0: i32) -> (i32, i32, i32) {
    %c0_i32 = arith.constant 0 : i32
    %c0_i32_0 = arith.constant 0 : i32
    %c0_i32_1 = arith.constant 0 : i32
    %c0_i32_2 = arith.constant 0 : i32
    return %c0_i32, %c0_i32_0, %c0_i32_1 : i32, i32, i32
  }
  func.func @transform_1(%arg0: i32) -> (i32, i32, i32) {
    %c0_i32 = arith.constant 0 : i32
    %c0_i32_0 = arith.constant 0 : i32
    %c0_i32_1 = arith.constant 0 : i32
    %c0_i32_2 = arith.constant 0 : i32
    return %c0_i32, %c0_i32_0, %c0_i32_1 : i32, i32, i32
  }
  func.func @transform_2(%arg0: i32) -> (i32, i32, i32) {
    %c0_i32 = arith.constant 0 : i32
    %c0_i32_0 = arith.constant 0 : i32
    %c0_i32_1 = arith.constant 0 : i32
    %c0_i32_2 = arith.constant 0 : i32
    return %c0_i32, %c0_i32_0, %c0_i32_1 : i32, i32, i32
  }
  func.func @transform_3(%arg0: i32) -> (i32, i32, i32) {
    %c0_i32 = arith.constant 0 : i32
    %c0_i32_0 = arith.constant 0 : i32
    %c0_i32_1 = arith.constant 0 : i32
    %c0_i32_2 = arith.constant 0 : i32
    return %c0_i32, %c0_i32_0, %c0_i32_1 : i32, i32, i32
  }
  func.func @transform_4(%arg0: i32) -> (i32, i32, i32) {
    %c0_i32 = arith.constant 0 : i32
    %c0_i32_0 = arith.constant 0 : i32
    %c0_i32_1 = arith.constant 0 : i32
    %c0_i32_2 = arith.constant 0 : i32
    return %c0_i32, %c0_i32_0, %c0_i32_1 : i32, i32, i32
  }
  func.func @transform_5(%arg0: i32) -> (i32, i32, i32) {
    %c0_i32 = arith.constant 0 : i32
    %c0_i32_0 = arith.constant 0 : i32
    %c0_i32_1 = arith.constant 0 : i32
    %c0_i32_2 = arith.constant 0 : i32
    return %c0_i32, %c0_i32_0, %c0_i32_1 : i32, i32, i32
  }
}

</mosaic_0001>

<llo_original>
// kernel: dilated_causal_conv_encoder.1
$region0: #{dilated_causal_conv_encoder.1}
  #allocation0 [shape = 'u32[]', space=smem, size = 0x4, offset = 0x4, fixed_abs, tag = 'smem constant byte address 0x4 - core index']
  #allocation1 [shape = 'u32[144,128]{1,0:T(1,128)}', space=vmem, size = 0x12000, scoped, tag = 'internal scratch']
  #allocation2 [shape = 'f32[2,32,32]{2,1,0:T(8,128)}', space=vmem, size = 0x8000, scoped, tag = 'scratch operand']
  %s0 = inlined_call_operand.vmem [shape: f32[2,16,32], index: 0, kind: input, shape index: {}]
  %s1 = inlined_call_operand.vmem [shape: f32[2,30,32], index: 1, kind: input, shape index: {}]
  %s2 = inlined_call_operand.vmem [shape: f32[4,16,32], index: 2, kind: input, shape index: {}]
  %s3 = inlined_call_operand.vmem [shape: f32[4,32,32], index: 3, kind: input, shape index: {}]
  %s4 = inlined_call_operand.hbm [shape: f32[2,16,32], index: 4, kind: output, shape index: {0}]
  %s5 = inlined_call_operand.vmem [shape: f32[2,30,32], index: 5, kind: output, shape index: {1}]
  %6 = xla_tuple %s4, %s5
  %s7 = sld [smem:[#allocation0]]
  $region34: #{dilated_causal_conv_encoder.1} parent=0
    _
  %s9 = ssub.s32 1, %s7
  %s10 = scalar_select 0, %s9, %s7
  $region1: #{dilated_causal_conv_encoder.1} parent=0
    #allocation3 [shape = 'u8[16384]{0}', space=vmem, size = 0x4000, scoped, tag = 'output window, operand 0, single buffered']
    #allocation4 [shape = 's32[1]{0}', space=sflag, size = 0x4, scoped, tag = 'scoped memory for dilated_causal_conv_encoder.1']
    %11 = vsyncpa [#allocation4], 0
    // Predicated region
    $region2: #{dilated_causal_conv_encoder.1} parent=1 // pred_check
      _
    $region3: #{dilated_causal_conv_encoder.1} parent=1 // pred_check_branch
      %13 = sbr.rel (0) target = $region5
    $region4: #{dilated_causal_conv_encoder.1} parent=1 // pred_region
      _
    $region5: #{dilated_causal_conv_encoder.1} parent=1 // pred_fallthru
      _
    // Predicated region
    $region6: #{dilated_causal_conv_encoder.1} parent=1 // pred_check
      _
    $region7: #{dilated_causal_conv_encoder.1} parent=1 // pred_check_branch
      %15 = sbr.rel (0) target = $region9
    $region8: #{dilated_causal_conv_encoder.1} parent=1 // pred_region
      _
    $region9: #{dilated_causal_conv_encoder.1} parent=1 // pred_fallthru
      _
    // Predicated region
    $region10: #{dilated_causal_conv_encoder.1} parent=1 // pred_check
      _
    $region11: #{dilated_causal_conv_encoder.1} parent=1 // pred_check_branch
      %17 = sbr.rel (0) target = $region13
    $region12: #{dilated_causal_conv_encoder.1} parent=1 // pred_region
      _
    $region13: #{dilated_causal_conv_encoder.1} parent=1 // pred_fallthru
      _
    // Predicated region
    $region14: #{dilated_causal_conv_encoder.1} parent=1 // pred_check
      _
    $region15: #{dilated_causal_conv_encoder.1} parent=1 // pred_check_branch
      %19 = sbr.rel (0) target = $region17
    $region16: #{dilated_causal_conv_encoder.1} parent=1 // pred_region
      _
    $region17: #{dilated_causal_conv_encoder.1} parent=1 // pred_fallthru
      _
    %v20 = vld [vmem:[%s0] sm:$0xff]
    %v21 = vld [vmem:[%s0 + $0x8] sm:$0xff]
    %vm22 = vcmask 261120
    %23 = vst.msk [vmem:[#allocation2 + $0x10] sm:$0xff] %vm22, %v20
    %24 = vst.msk [vmem:[#allocation2 + $0x18] sm:$0xff] %vm22, %v21
    %s25 = scalar_lea.vmem %s0, 16
    %v26 = vld [vmem:[%s25] sm:$0xff]
    %v27 = vld [vmem:[%s25 + $0x8] sm:$0xff]
    %s28 = scalar_lea.vmem [#allocation2], 32
    %29 = vst.msk [vmem:[%s28 + $0x10] sm:$0xff] %vm22, %v26
    %30 = vst.msk [vmem:[%s28 + $0x18] sm:$0xff] %vm22, %v27
    %v31 = vld [vmem:[%s2] sm:$0xff]
    %v32 = vld [vmem:[%s2 + $0x8] sm:$0xff]
    %v33 = vld [vmem:[%s1] sm:$0x3]
    %vm34 = vcmask 254976
    %35 = vst.msk [vmem:[#allocation2 + $0xe] sm:$0x3] %vm34, %v33
    %v36 = vld [vmem:[#allocation2 + $0x1e] sm:$0x3]
    %37 = vst.msk [vmem:[%s5] sm:$0x3] %vm34, %v36
    %v38 = vld [vmem:[#allocation2 + $0xe] sm:$0xff]
    %v39 = vld [vmem:[#allocation2 + $0x16] sm:$0xff]
    %v40 = vld [vmem:[#allocation2 + $0xf] sm:$0xff]
    %v41 = vld [vmem:[#allocation2 + $0x17] sm:$0xff]
    %v42 = vld [vmem:[#allocation2 + $0x10] sm:$0xff]
    %v43 = vld [vmem:[#allocation2 + $0x18] sm:$0xff]
    %v44 = vlaneseq
    %v45 = vshrl.u32 %v44, 7
    %v46 = vsub.s32 0, %v45
    %v47 = vrot.slane %v31, %v46
    %v48 = vmul.f32 %v38, %v47
    %v49 = vmul.f32 %v39, %v47
    %v50 = vlaneseq
    %v51 = vshrl.u32 %v50, 7
    %v52 = vsub.s32 1, %v51
    %v53 = vrot.slane %v31, %v52
    %v54 = vmul.f32 %v40, %v53
    %v55 = vmul.f32 %v41, %v53
    %v56 = vadd.f32 %v48, %v54
    %v57 = vadd.f32 %v49, %v55
    %v58 = vlaneseq
    %v59 = vshrl.u32 %v58, 7
    %v60 = vsub.s32 2, %v59
    %v61 = vrot.slane %v31, %v60
    %v62 = vmul.f32 %v42, %v61
    %v63 = vmul.f32 %v43, %v61
    %v64 = vadd.f32 %v56, %v62
    %v65 = vadd.f32 %v57, %v63
    %v66 = vlaneseq
    %v67 = vshrl.u32 %v66, 7
    %v68 = vsub.s32 3, %v67
    %v69 = vrot.slane %v31, %v68
    %v70 = vadd.f32 %v64, %v69
    %v71 = vadd.f32 %v65, %v69
    %s72 = scalar_lea.vmem %s1, 32
    %v73 = vld [vmem:[%s72] sm:$0x3]
    %74 = vst.msk [vmem:[%s28 + $0xe] sm:$0x3] %vm34, %v73
    %v75 = vld [vmem:[%s28 + $0x1e] sm:$0x3]
    %s76 = scalar_lea.vmem %s5, 32
    %77 = vst.msk [vmem:[%s76] sm:$0x3] %vm34, %v75
    %v78 = vld [vmem:[%s28 + $0xe] sm:$0xff]
    %v79 = vld [vmem:[%s28 + $0x16] sm:$0xff]
    %v80 = vld [vmem:[%s28 + $0xf] sm:$0xff]
    %v81 = vld [vmem:[%s28 + $0x17] sm:$0xff]
    %v82 = vld [vmem:[%s28 + $0x10] sm:$0xff]
    %v83 = vld [vmem:[%s28 + $0x18] sm:$0xff]
    %v84 = vmul.f32 %v78, %v47
    %v85 = vmul.f32 %v79, %v47
    %v86 = vmul.f32 %v80, %v53
    %v87 = vmul.f32 %v81, %v53
    %v88 = vadd.f32 %v84, %v86
    %v89 = vadd.f32 %v85, %v87
    %v90 = vmul.f32 %v82, %v61
    %v91 = vmul.f32 %v83, %v61
    %v92 = vadd.f32 %v88, %v90
    %v93 = vadd.f32 %v89, %v91
    %v94 = vadd.f32 %v92, %v69
    %v95 = vadd.f32 %v93, %v69
    %v96 = vsel %vm22, %v70, 0.0
    %97 = vadd.xlane.f32.xlu0 %v96
    %v98 = vpop.xlane.xlu0 %97
    %v99 = vsel %vm22, %v71, 0.0
    %100 = vadd.xlane.f32.xlu0 %v99
    %v101 = vpop.xlane.xlu0 %100
    %v102 = vsel %vm22, %v94, 0.0
    %103 = vadd.xlane.f32.xlu0 %v102
    %v104 = vpop.xlane.xlu0 %103
    %v105 = vsel %vm22, %v95, 0.0
    %106 = vadd.xlane.f32.xlu0 %v105
    %v107 = vpop.xlane.xlu0 %106
    %v108 = vmul.f32 %v98, 0.03125
    %v109 = vmul.f32 %v101, 0.03125
    %v110 = vmul.f32 %v104, 0.03125
    %v111 = vmul.f32 %v107, 0.03125
    %v112 = vsub.f32 %v70, %v108
    %v113 = vsub.f32 %v71, %v109
    %v114 = vsub.f32 %v94, %v110
    %v115 = vsub.f32 %v95, %v111
    %v116 = vmul.f32 %v112, %v112
    %v117 = vmul.f32 %v113, %v113
    %v118 = vmul.f32 %v114, %v114
    %v119 = vmul.f32 %v115, %v115
    %v120 = vsel %vm22, %v116, 0.0
    %121 = vadd.xlane.f32.xlu0 %v120
    %v122 = vpop.xlane.xlu0 %121
    %v123 = vsel %vm22, %v117, 0.0
    %124 = vadd.xlane.f32.xlu0 %v123
    %v125 = vpop.xlane.xlu0 %124
    %v126 = vsel %vm22, %v118, 0.0
    %127 = vadd.xlane.f32.xlu0 %v126
    %v128 = vpop.xlane.xlu0 %127
    %v129 = vsel %vm22, %v119, 0.0
    %130 = vadd.xlane.f32.xlu0 %v129
    %v131 = vpop.xlane.xlu0 %130
    %v132 = vmul.f32 %v122, 0.03125
    %v133 = vmul.f32 %v125, 0.03125
    %v134 = vmul.f32 %v128, 0.03125
    %v135 = vmul.f32 %v131, 0.03125
    %v136 = vadd.f32 %v132, 1e-05
    %v137 = vadd.f32 %v133, 1e-05
    %v138 = vadd.f32 %v134, 1e-05
    %v139 = vadd.f32 %v135, 1e-05
    %v140 = vrsqrt.pop %v136
    %v141 = vrsqrt.pop %v137
    %v142 = vrsqrt.pop %v138
    %v143 = vrsqrt.pop %v139
    %v144 = vmul.f32 %v112, %v140
    %v145 = vmul.f32 %v113, %v141
    %v146 = vmul.f32 %v114, %v142
    %v147 = vmul.f32 %v115, %v143
    %v148 = vlaneseq
    %v149 = vshrl.u32 %v148, 7
    %v150 = vsub.s32 4, %v149
    %v151 = vrot.slane %v31, %v150
    %v152 = vmul.f32 %v144, %v151
    %v153 = vmul.f32 %v145, %v151
    %v154 = vmul.f32 %v146, %v151
    %v155 = vmul.f32 %v147, %v151
    %v156 = vlaneseq
    %v157 = vshrl.u32 %v156, 7
    %v158 = vsub.s32 5, %v157
    %v159 = vrot.slane %v31, %v158
    %v160 = vadd.f32 %v152, %v159
    %v161 = vadd.f32 %v153, %v159
    %v162 = vadd.f32 %v154, %v159
    %v163 = vadd.f32 %v155, %v159
    %v164 = vmax.f32 %v160, 0.0
    %v165 = vmax.f32 %v161, 0.0
    %v166 = vmax.f32 %v162, 0.0
    %v167 = vmax.f32 %v163, 0.0
    %v168 = vld [vmem:[%s3] sm:$0xff]
    %v169 = vld [vmem:[%s3 + $0x8] sm:$0xff]
    %v170 = vld [vmem:[%s3 + $0x10] sm:$0xff]
    %v171 = vld [vmem:[%s3 + $0x18] sm:$0xff]
    %v172 = vlaneseq
    %v173 = vshrl.u32 %v172, 7
    %v174 = vsub.s32 6, %v173
    %v175 = vrot.slane %v31, %v174
    %v177 = vsel %vm22, %v164, 0
    %v180 = vsel %vm22, %v165, 0
    %v183 = vsel %vm22, %v166, 0
    %v186 = vsel %vm22, %v167, 0
    %188 = vmatprep.subr.mxu0 0.0
    %189 = vmatpush1.msra.mxu0 %v168
    %190 = vmatprep.subr.mxu0 0.0
    %191 = vmatpush1.msra.mxu0 %v169
    %192 = vmatprep.subr.mxu0 0.0
    %193 = vmatpush1.msra.mxu0 %v170
    %194 = vmatprep.subr.mxu0 0.0
    %195 = vmatpush1.msra.mxu0 %v171
    %196 = vmatprep.subr.mxu0 0.0
    %197 = vmatpush1.msra.mxu0 0.0
    %198 = vmatprep.subr.mxu0 0.0
    %199 = vmatpush1.msra.mxu0 0.0
    %200 = vmatprep.subr.mxu0 0.0
    %201 = vmatpush1.msra.mxu0 0.0
    %202 = vmatprep.subr.mxu0 0.0
    %203 = vmatpush1.msra.mxu0 0.0
    %204 = vmatprep.subr.mxu0 0.0
    %205 = vmatpush1.msra.mxu0 0.0
    %206 = vmatprep.subr.mxu0 0.0
    %207 = vmatpush1.msra.mxu0 0.0
    %208 = vmatprep.subr.mxu0 0.0
    %209 = vmatpush1.msra.mxu0 0.0
    %210 = vmatprep.subr.mxu0 0.0
    %211 = vmatpush1.msra.mxu0 0.0
    %212 = vmatprep.subr.mxu0 0.0
    %213 = vmatpush1.msra.mxu0 0.0
    %214 = vmatprep.subr.mxu0 0.0
    %215 = vmatpush1.msra.mxu0 0.0
    %216 = vmatprep.subr.mxu0 0.0
    %217 = vmatpush1.msra.mxu0 0.0
    %218 = vmatprep.subr.mxu0 0.0
    %219 = vmatpush1.msra.mxu0 0.0
    %220 = vmatprep.subr.mxu0 0.0
    %221 = vmatpush1.msra.mxu0 0.0
    %222 = vmatprep.subr.mxu0 0.0
    %223 = vmatpush1.msra.mxu0 0.0
    %224 = vmatprep.subr.mxu0 0.0
    %225 = vmatpush1.msra.mxu0 0.0
    %226 = vmatprep.subr.mxu0 0.0
    %227 = vmatpush1.msra.mxu0 0.0
    %228 = vmatprep.subr.mxu0 0.0
    %229 = vmatpush1.msra.mxu0 0.0
    %230 = vmatprep.subr.mxu0 0.0
    %231 = vmatpush1.msra.mxu0 0.0
    %232 = vmatprep.subr.mxu0 0.0
    %233 = vmatpush1.msra.mxu0 0.0
    %234 = vmatprep.subr.mxu0 0.0
    %235 = vmatpush1.msra.mxu0 0.0
    %236 = vmatprep.subr.mxu0 0.0
    %237 = vmatpush1.msra.mxu0 0.0
    %238 = vmatprep.subr.mxu0 0.0
    %239 = vmatpush1.msra.mxu0 0.0
    %240 = vmatprep.subr.mxu0 0.0
    %241 = vmatpush1.msra.mxu0 0.0
    %242 = vmatprep.subr.mxu0 0.0
    %243 = vmatpush1.msra.mxu0 0.0
    %244 = vmatprep.subr.mxu0 0.0
    %245 = vmatpush1.msra.mxu0 0.0
    %246 = vmatprep.subr.mxu0 0.0
    %247 = vmatpush1.msra.mxu0 0.0
    %248 = vmatprep.subr.mxu0 0.0
    %249 = vmatpush1.msra.mxu0 0.0
    %250 = vmatprep.subr.mxu0 0.0
    %251 = vmatpush1.msra.mxu0 0.0
    %252 = vmatprep.mubr.f32.mxu0 0.0
    %253 = vmatmul.mubr.f32.gmra.mrb[0].mxu0 %v177
    %v254 = vpop.f32.mrb[0].mxu0
    %v255 = vadd.f32 %v175, %v254
    %v256 = vpop.f32.mrb[0].mxu0
    %257 = vmatprep.mubr.f32.mxu0 0.0
    %258 = vmatmul.mubr.f32.gmra.mrb[0].mxu0 %v180
    %v259 = vpop.f32.mrb[0].mxu0
    %v260 = vadd.f32 %v175, %v259
    %v261 = vpop.f32.mrb[0].mxu0
    %262 = vmatprep.mubr.f32.mxu0 0.0
    %263 = vmatmul.mubr.f32.gmra.mrb[0].mxu0 %v183
    %v264 = vpop.f32.mrb[0].mxu0
    %v265 = vadd.f32 %v175, %v264
    %v266 = vpop.f32.mrb[0].mxu0
    %267 = vmatprep.mubr.f32.mxu0 0.0
    %268 = vmatmul.mubr.f32.gmra.mrb[0].mxu0 %v186
    %v269 = vpop.f32.mrb[0].mxu0
    %v270 = vadd.f32 %v175, %v269
    %v271 = vpop.f32.mrb[0].mxu0
    %272 = vdwg.mxu0
    %v273 = vsel %vm22, %v255, 0.0
    %274 = vadd.xlane.f32.xlu0 %v273
    %v275 = vpop.xlane.xlu0 %274
    %v276 = vsel %vm22, %v260, 0.0
    %277 = vadd.xlane.f32.xlu0 %v276
    %v278 = vpop.xlane.xlu0 %277
    %v279 = vsel %vm22, %v265, 0.0
    %280 = vadd.xlane.f32.xlu0 %v279
    %v281 = vpop.xlane.xlu0 %280
    %v282 = vsel %vm22, %v270, 0.0
    %283 = vadd.xlane.f32.xlu0 %v282
    %v284 = vpop.xlane.xlu0 %283
    %v285 = vmul.f32 %v275, 0.03125
    %v286 = vmul.f32 %v278, 0.03125
    %v287 = vmul.f32 %v281, 0.03125
    %v288 = vmul.f32 %v284, 0.03125
    %v289 = vsub.f32 %v255, %v285
    %v290 = vsub.f32 %v260, %v286
    %v291 = vsub.f32 %v265, %v287
    %v292 = vsub.f32 %v270, %v288
    %v293 = vmul.f32 %v289, %v289
    %v294 = vmul.f32 %v290, %v290
    %v295 = vmul.f32 %v291, %v291
    %v296 = vmul.f32 %v292, %v292
    %v297 = vsel %vm22, %v293, 0.0
    %298 = vadd.xlane.f32.xlu0 %v297
    %v299 = vpop.xlane.xlu0 %298
    %v300 = vsel %vm22, %v294, 0.0
    %301 = vadd.xlane.f32.xlu0 %v300
    %v302 = vpop.xlane.xlu0 %301
    %v303 = vsel %vm22, %v295, 0.0
    %304 = vadd.xlane.f32.xlu0 %v303
    %v305 = vpop.xlane.xlu0 %304
    %v306 = vsel %vm22, %v296, 0.0
    %307 = vadd.xlane.f32.xlu0 %v306
    %v308 = vpop.xlane.xlu0 %307
    %v309 = vmul.f32 %v299, 0.03125
    %v310 = vmul.f32 %v302, 0.03125
    %v311 = vmul.f32 %v305, 0.03125
    %v312 = vmul.f32 %v308, 0.03125
    %v313 = vadd.f32 %v309, 1e-05
    %v314 = vadd.f32 %v310, 1e-05
    %v315 = vadd.f32 %v311, 1e-05
    %v316 = vadd.f32 %v312, 1e-05
    %v317 = vrsqrt.pop %v313
    %v318 = vrsqrt.pop %v314
    %v319 = vrsqrt.pop %v315
    %v320 = vrsqrt.pop %v316
    %v321 = vmul.f32 %v289, %v317
    %v322 = vmul.f32 %v290, %v318
    %v323 = vmul.f32 %v291, %v319
    %v324 = vmul.f32 %v292, %v320
    %v325 = vlaneseq
    %v326 = vshrl.u32 %v325, 7
    %v327 = vsub.s32 7, %v326
    %v328 = vrot.slane %v31, %v327
    %v329 = vmul.f32 %v321, %v328
    %v330 = vmul.f32 %v322, %v328
    %v331 = vmul.f32 %v323, %v328
    %v332 = vmul.f32 %v324, %v328
    %v333 = vlaneseq
    %v334 = vshrl.u32 %v333, 7
    %v335 = vsub.s32 0, %v334
    %v336 = vrot.slane %v32, %v335
    %v337 = vadd.f32 %v329, %v336
    %v338 = vadd.f32 %v330, %v336
    %v339 = vadd.f32 %v331, %v336
    %v340 = vadd.f32 %v332, %v336
    %v341 = vmax.f32 %v337, 0.0
    %v342 = vmax.f32 %v338, 0.0
    %v343 = vmax.f32 %v339, 0.0
    %v344 = vmax.f32 %v340, 0.0
    %v345 = vld [vmem:[#allocation2 + $0x10] sm:$0xff]
    %v346 = vld [vmem:[#allocation2 + $0x18] sm:$0xff]
    %v347 = vadd.f32 %v345, %v341
    %v348 = vadd.f32 %v346, %v342
    %349 = vst.msk [vmem:[#allocation2 + $0x10] sm:$0xff] %vm22, %v347
    %350 = vst.msk [vmem:[#allocation2 + $0x18] sm:$0xff] %vm22, %v348
    %v351 = vld [vmem:[%s28 + $0x10] sm:$0xff]
    %v352 = vld [vmem:[%s28 + $0x18] sm:$0xff]
    %v353 = vadd.f32 %v351, %v343
    %v354 = vadd.f32 %v352, %v344
    %355 = vst.msk [vmem:[%s28 + $0x10] sm:$0xff] %vm22, %v353
    %356 = vst.msk [vmem:[%s28 + $0x18] sm:$0xff] %vm22, %v354
    %s357 = scalar_lea.vmem %s2, 16
    %v358 = vld [vmem:[%s357] sm:$0xff]
    %v359 = vld [vmem:[%s357 + $0x8] sm:$0xff]
    %v360 = vld [vmem:[%s1 + $0x2] sm:$0xf]
    %vm361 = vcmask 257024
    %362 = vst.msk [vmem:[#allocation2 + $0xc] sm:$0xf] %vm361, %v360
    %v363 = vld [vmem:[#allocation2 + $0x1c] sm:$0xf]
    %364 = vst.msk [vmem:[%s5 + $0x2] sm:$0xf] %vm361, %v363
    %v365 = vld [vmem:[#allocation2 + $0xc] sm:$0xff]
    %v366 = vld [vmem:[#allocation2 + $0x14] sm:$0xff]
    %v367 = vld [vmem:[#allocation2 + $0xe] sm:$0xff]
    %v368 = vld [vmem:[#allocation2 + $0x16] sm:$0xff]
    %v369 = vld [vmem:[#allocation2 + $0x10] sm:$0xff]
    %v370 = vld [vmem:[#allocation2 + $0x18] sm:$0xff]
    %v371 = vlaneseq
    %v372 = vshrl.u32 %v371, 7
    %v373 = vsub.s32 0, %v372
    %v374 = vrot.slane %v358, %v373
    %v375 = vmul.f32 %v365, %v374
    %v376 = vmul.f32 %v366, %v374
    %v377 = vlaneseq
    %v378 = vshrl.u32 %v377, 7
    %v379 = vsub.s32 1, %v378
    %v380 = vrot.slane %v358, %v379
    %v381 = vmul.f32 %v367, %v380
    %v382 = vmul.f32 %v368, %v380
    %v383 = vadd.f32 %v375, %v381
    %v384 = vadd.f32 %v376, %v382
    %v385 = vlaneseq
    %v386 = vshrl.u32 %v385, 7
    %v387 = vsub.s32 2, %v386
    %v388 = vrot.slane %v358, %v387
    %v389 = vmul.f32 %v369, %v388
    %v390 = vmul.f32 %v370, %v388
    %v391 = vadd.f32 %v383, %v389
    %v392 = vadd.f32 %v384, %v390
    %v393 = vlaneseq
    %v394 = vshrl.u32 %v393, 7
    %v395 = vsub.s32 3, %v394
    %v396 = vrot.slane %v358, %v395
    %v397 = vadd.f32 %v391, %v396
    %v398 = vadd.f32 %v392, %v396
    %v399 = vld [vmem:[%s72 + $0x2] sm:$0xf]
    %400 = vst.msk [vmem:[%s28 + $0xc] sm:$0xf] %vm361, %v399
    %v401 = vld [vmem:[%s28 + $0x1c] sm:$0xf]
    %402 = vst.msk [vmem:[%s76 + $0x2] sm:$0xf] %vm361, %v401
    %v403 = vld [vmem:[%s28 + $0xc] sm:$0xff]
    %v404 = vld [vmem:[%s28 + $0x14] sm:$0xff]
    %v405 = vld [vmem:[%s28 + $0xe] sm:$0xff]
    %v406 = vld [vmem:[%s28 + $0x16] sm:$0xff]
    %v407 = vld [vmem:[%s28 + $0x10] sm:$0xff]
    %v408 = vld [vmem:[%s28 + $0x18] sm:$0xff]
    %v409 = vmul.f32 %v403, %v374
    %v410 = vmul.f32 %v404, %v374
    %v411 = vmul.f32 %v405, %v380
    %v412 = vmul.f32 %v406, %v380
    %v413 = vadd.f32 %v409, %v411
    %v414 = vadd.f32 %v410, %v412
    %v415 = vmul.f32 %v407, %v388
    %v416 = vmul.f32 %v408, %v388
    %v417 = vadd.f32 %v413, %v415
    %v418 = vadd.f32 %v414, %v416
    %v419 = vadd.f32 %v417, %v396
    %v420 = vadd.f32 %v418, %v396
    %v421 = vsel %vm22, %v397, 0.0
    %422 = vadd.xlane.f32.xlu0 %v421
    %v423 = vpop.xlane.xlu0 %422
    %v424 = vsel %vm22, %v398, 0.0
    %425 = vadd.xlane.f32.xlu0 %v424
    %v426 = vpop.xlane.xlu0 %425
    %v427 = vsel %vm22, %v419, 0.0
    %428 = vadd.xlane.f32.xlu0 %v427
    %v429 = vpop.xlane.xlu0 %428
    %v430 = vsel %vm22, %v420, 0.0
    %431 = vadd.xlane.f32.xlu0 %v430
    %v432 = vpop.xlane.xlu0 %431
    %v433 = vmul.f32 %v423, 0.03125
    %v434 = vmul.f32 %v426, 0.03125
    %v435 = vmul.f32 %v429, 0.03125
    %v436 = vmul.f32 %v432, 0.03125
    %v437 = vsub.f32 %v397, %v433
    %v438 = vsub.f32 %v398, %v434
    %v439 = vsub.f32 %v419, %v435
    %v440 = vsub.f32 %v420, %v436
    %v441 = vmul.f32 %v437, %v437
    %v442 = vmul.f32 %v438, %v438
    %v443 = vmul.f32 %v439, %v439
    %v444 = vmul.f32 %v440, %v440
    %v445 = vsel %vm22, %v441, 0.0
    %446 = vadd.xlane.f32.xlu0 %v445
    %v447 = vpop.xlane.xlu0 %446
    %v448 = vsel %vm22, %v442, 0.0
    %449 = vadd.xlane.f32.xlu0 %v448
    %v450 = vpop.xlane.xlu0 %449
    %v451 = vsel %vm22, %v443, 0.0
    %452 = vadd.xlane.f32.xlu0 %v451
    %v453 = vpop.xlane.xlu0 %452
    %v454 = vsel %vm22, %v444, 0.0
    %455 = vadd.xlane.f32.xlu0 %v454
    %v456 = vpop.xlane.xlu0 %455
    %v457 = vmul.f32 %v447, 0.03125
    %v458 = vmul.f32 %v450, 0.03125
    %v459 = vmul.f32 %v453, 0.03125
    %v460 = vmul.f32 %v456, 0.03125
    %v461 = vadd.f32 %v457, 1e-05
    %v462 = vadd.f32 %v458, 1e-05
    %v463 = vadd.f32 %v459, 1e-05
    %v464 = vadd.f32 %v460, 1e-05
    %v465 = vrsqrt.pop %v461
    %v466 = vrsqrt.pop %v462
    %v467 = vrsqrt.pop %v463
    %v468 = vrsqrt.pop %v464
    %v469 = vmul.f32 %v437, %v465
    %v470 = vmul.f32 %v438, %v466
    %v471 = vmul.f32 %v439, %v467
    %v472 = vmul.f32 %v440, %v468
    %v473 = vlaneseq
    %v474 = vshrl.u32 %v473, 7
    %v475 = vsub.s32 4, %v474
    %v476 = vrot.slane %v358, %v475
    %v477 = vmul.f32 %v469, %v476
    %v478 = vmul.f32 %v470, %v476
    %v479 = vmul.f32 %v471, %v476
    %v480 = vmul.f32 %v472, %v476
    %v481 = vlaneseq
    %v482 = vshrl.u32 %v481, 7
    %v483 = vsub.s32 5, %v482
    %v484 = vrot.slane %v358, %v483
    %v485 = vadd.f32 %v477, %v484
    %v486 = vadd.f32 %v478, %v484
    %v487 = vadd.f32 %v479, %v484
    %v488 = vadd.f32 %v480, %v484
    %v489 = vmax.f32 %v485, 0.0
    %v490 = vmax.f32 %v486, 0.0
    %v491 = vmax.f32 %v487, 0.0
    %v492 = vmax.f32 %v488, 0.0
    %s493 = scalar_lea.vmem %s3, 32
    %v494 = vld [vmem:[%s493] sm:$0xff]
    %v495 = vld [vmem:[%s493 + $0x8] sm:$0xff]
    %v496 = vld [vmem:[%s493 + $0x10] sm:$0xff]
    %v497 = vld [vmem:[%s493 + $0x18] sm:$0xff]
    %v498 = vlaneseq
    %v499 = vshrl.u32 %v498, 7
    %v500 = vsub.s32 6, %v499
    %v501 = vrot.slane %v358, %v500
    %v503 = vsel %vm22, %v489, 0
    %v506 = vsel %vm22, %v490, 0
    %v509 = vsel %vm22, %v491, 0
    %v512 = vsel %vm22, %v492, 0
    %514 = vmatprep.subr.mxu0 0.0
    %515 = vmatpush1.msra.mxu0 %v494
    %516 = vmatprep.subr.mxu0 0.0
    %517 = vmatpush1.msra.mxu0 %v495
    %518 = vmatprep.subr.mxu0 0.0
    %519 = vmatpush1.msra.mxu0 %v496
    %520 = vmatprep.subr.mxu0 0.0
    %521 = vmatpush1.msra.mxu0 %v497
    %522 = vmatprep.subr.mxu0 0.0
    %523 = vmatpush1.msra.mxu0 0.0
    %524 = vmatprep.subr.mxu0 0.0
    %525 = vmatpush1.msra.mxu0 0.0
    %526 = vmatprep.subr.mxu0 0.0
    %527 = vmatpush1.msra.mxu0 0.0
    %528 = vmatprep.subr.mxu0 0.0
    %529 = vmatpush1.msra.mxu0 0.0
    %530 = vmatprep.subr.mxu0 0.0
    %531 = vmatpush1.msra.mxu0 0.0
    %532 = vmatprep.subr.mxu0 0.0
    %533 = vmatpush1.msra.mxu0 0.0
    %534 = vmatprep.subr.mxu0 0.0
    %535 = vmatpush1.msra.mxu0 0.0
    %536 = vmatprep.subr.mxu0 0.0
    %537 = vmatpush1.msra.mxu0 0.0
    %538 = vmatprep.subr.mxu0 0.0
    %539 = vmatpush1.msra.mxu0 0.0
    %540 = vmatprep.subr.mxu0 0.0
    %541 = vmatpush1.msra.mxu0 0.0
    %542 = vmatprep.subr.mxu0 0.0
    %543 = vmatpush1.msra.mxu0 0.0
    %544 = vmatprep.subr.mxu0 0.0
    %545 = vmatpush1.msra.mxu0 0.0
    %546 = vmatprep.subr.mxu0 0.0
    %547 = vmatpush1.msra.mxu0 0.0
    %548 = vmatprep.subr.mxu0 0.0
    %549 = vmatpush1.msra.mxu0 0.0
    %550 = vmatprep.subr.mxu0 0.0
    %551 = vmatpush1.msra.mxu0 0.0
    %552 = vmatprep.subr.mxu0 0.0
    %553 = vmatpush1.msra.mxu0 0.0
    %554 = vmatprep.subr.mxu0 0.0
    %555 = vmatpush1.msra.mxu0 0.0
    %556 = vmatprep.subr.mxu0 0.0
    %557 = vmatpush1.msra.mxu0 0.0
    %558 = vmatprep.subr.mxu0 0.0
    %559 = vmatpush1.msra.mxu0 0.0
    %560 = vmatprep.subr.mxu0 0.0
    %561 = vmatpush1.msra.mxu0 0.0
    %562 = vmatprep.subr.mxu0 0.0
    %563 = vmatpush1.msra.mxu0 0.0
    %564 = vmatprep.subr.mxu0 0.0
    %565 = vmatpush1.msra.mxu0 0.0
    %566 = vmatprep.subr.mxu0 0.0
    %567 = vmatpush1.msra.mxu0 0.0
    %568 = vmatprep.subr.mxu0 0.0
    %569 = vmatpush1.msra.mxu0 0.0
    %570 = vmatprep.subr.mxu0 0.0
    %571 = vmatpush1.msra.mxu0 0.0
    %572 = vmatprep.subr.mxu0 0.0
    %573 = vmatpush1.msra.mxu0 0.0
    %574 = vmatprep.subr.mxu0 0.0
    %575 = vmatpush1.msra.mxu0 0.0
    %576 = vmatprep.subr.mxu0 0.0
    %577 = vmatpush1.msra.mxu0 0.0
    %578 = vmatprep.mubr.f32.mxu0 0.0
    %579 = vmatmul.mubr.f32.gmra.mrb[0].mxu0 %v503
    %v580 = vpop.f32.mrb[0].mxu0
    %v581 = vadd.f32 %v501, %v580
    %v582 = vpop.f32.mrb[0].mxu0
    %583 = vmatprep.mubr.f32.mxu0 0.0
    %584 = vmatmul.mubr.f32.gmra.mrb[0].mxu0 %v506
    %v585 = vpop.f32.mrb[0].mxu0
    %v586 = vadd.f32 %v501, %v585
    %v587 = vpop.f32.mrb[0].mxu0
    %588 = vmatprep.mubr.f32.mxu0 0.0
    %589 = vmatmul.mubr.f32.gmra.mrb[0].mxu0 %v509
    %v590 = vpop.f32.mrb[0].mxu0
    %v591 = vadd.f32 %v501, %v590
    %v592 = vpop.f32.mrb[0].mxu0
    %593 = vmatprep.mubr.f32.mxu0 0.0
    %594 = vmatmul.mubr.f32.gmra.mrb[0].mxu0 %v512
    %v595 = vpop.f32.mrb[0].mxu0
    %v596 = vadd.f32 %v501, %v595
    %v597 = vpop.f32.mrb[0].mxu0
    %598 = vdwg.mxu0
    %v599 = vsel %vm22, %v581, 0.0
    %600 = vadd.xlane.f32.xlu0 %v599
    %v601 = vpop.xlane.xlu0 %600
    %v602 = vsel %vm22, %v586, 0.0
    %603 = vadd.xlane.f32.xlu0 %v602
    %v604 = vpop.xlane.xlu0 %603
    %v605 = vsel %vm22, %v591, 0.0
    %606 = vadd.xlane.f32.xlu0 %v605
    %v607 = vpop.xlane.xlu0 %606
    %v608 = vsel %vm22, %v596, 0.0
    %609 = vadd.xlane.f32.xlu0 %v608
    %v610 = vpop.xlane.xlu0 %609
    %v611 = vmul.f32 %v601, 0.03125
    %v612 = vmul.f32 %v604, 0.03125
    %v613 = vmul.f32 %v607, 0.03125
    %v614 = vmul.f32 %v610, 0.03125
    %v615 = vsub.f32 %v581, %v611
    %v616 = vsub.f32 %v586, %v612
    %v617 = vsub.f32 %v591, %v613
    %v618 = vsub.f32 %v596, %v614
    %v619 = vmul.f32 %v615, %v615
    %v620 = vmul.f32 %v616, %v616
    %v621 = vmul.f32 %v617, %v617
    %v622 = vmul.f32 %v618, %v618
    %v623 = vsel %vm22, %v619, 0.0
    %624 = vadd.xlane.f32.xlu0 %v623
    %v625 = vpop.xlane.xlu0 %624
    %v626 = vsel %vm22, %v620, 0.0
    %627 = vadd.xlane.f32.xlu0 %v626
    %v628 = vpop.xlane.xlu0 %627
    %v629 = vsel %vm22, %v621, 0.0
    %630 = vadd.xlane.f32.xlu0 %v629
    %v631 = vpop.xlane.xlu0 %630
    %v632 = vsel %vm22, %v622, 0.0
    %633 = vadd.xlane.f32.xlu0 %v632
    %v634 = vpop.xlane.xlu0 %633
    %v635 = vmul.f32 %v625, 0.03125
    %v636 = vmul.f32 %v628, 0.03125
    %v637 = vmul.f32 %v631, 0.03125
    %v638 = vmul.f32 %v634, 0.03125
    %v639 = vadd.f32 %v635, 1e-05
    %v640 = vadd.f32 %v636, 1e-05
    %v641 = vadd.f32 %v637, 1e-05
    %v642 = vadd.f32 %v638, 1e-05
    %v643 = vrsqrt.pop %v639
    %v644 = vrsqrt.pop %v640
    %v645 = vrsqrt.pop %v641
    %v646 = vrsqrt.pop %v642
    %v647 = vmul.f32 %v615, %v643
    %v648 = vmul.f32 %v616, %v644
    %v649 = vmul.f32 %v617, %v645
    %v650 = vmul.f32 %v618, %v646
    %v651 = vlaneseq
    %v652 = vshrl.u32 %v651, 7
    %v653 = vsub.s32 7, %v652
    %v654 = vrot.slane %v358, %v653
    %v655 = vmul.f32 %v647, %v654
    %v656 = vmul.f32 %v648, %v654
    %v657 = vmul.f32 %v649, %v654
    %v658 = vmul.f32 %v650, %v654
    %v659 = vlaneseq
    %v660 = vshrl.u32 %v659, 7
    %v661 = vsub.s32 0, %v660
    %v662 = vrot.slane %v359, %v661
    %v663 = vadd.f32 %v655, %v662
    %v664 = vadd.f32 %v656, %v662
    %v665 = vadd.f32 %v657, %v662
    %v666 = vadd.f32 %v658, %v662
    %v667 = vmax.f32 %v663, 0.0
    %v668 = vmax.f32 %v664, 0.0
    %v669 = vmax.f32 %v665, 0.0
    %v670 = vmax.f32 %v666, 0.0
    %v671 = vld [vmem:[#allocation2 + $0x10] sm:$0xff]
    %v672 = vld [vmem:[#allocation2 + $0x18] sm:$0xff]
    %v673 = vadd.f32 %v671, %v667
    %v674 = vadd.f32 %v672, %v668
    %675 = vst.msk [vmem:[#allocation2 + $0x10] sm:$0xff] %vm22, %v673
    %676 = vst.msk [vmem:[#allocation2 + $0x18] sm:$0xff] %vm22, %v674
    %v677 = vld [vmem:[%s28 + $0x10] sm:$0xff]
    %v678 = vld [vmem:[%s28 + $0x18] sm:$0xff]
    %v679 = vadd.f32 %v677, %v669
    %v680 = vadd.f32 %v678, %v670
    %681 = vst.msk [vmem:[%s28 + $0x10] sm:$0xff] %vm22, %v679
    %682 = vst.msk [vmem:[%s28 + $0x18] sm:$0xff] %vm22, %v680
    %s683 = scalar_lea.vmem %s2, 32
    %v684 = vld [vmem:[%s683] sm:$0xff]
    %v685 = vld [vmem:[%s683 + $0x8] sm:$0xff]
    %v686 = vld [vmem:[%s1 + $0x6] sm:$0xff]
    %687 = vst.msk [vmem:[#allocation2 + $0x8] sm:$0xff] %vm22, %v686
    %v688 = vld [vmem:[#allocation2 + $0x18] sm:$0xff]
    %689 = vst.msk [vmem:[%s5 + $0x6] sm:$0xff] %vm22, %v688
    %v690 = vld [vmem:[#allocation2 + $0x8] sm:$0xff]
    %v691 = vld [vmem:[#allocation2 + $0x10] sm:$0xff]
    %v692 = vld [vmem:[#allocation2 + $0xc] sm:$0xff]
    %v693 = vld [vmem:[#allocation2 + $0x14] sm:$0xff]
    %v694 = vld [vmem:[#allocation2 + $0x18] sm:$0xff]
    %v695 = vlaneseq
    %v696 = vshrl.u32 %v695, 7
    %v697 = vsub.s32 0, %v696
    %v698 = vrot.slane %v684, %v697
    %v699 = vmul.f32 %v690, %v698
    %v700 = vmul.f32 %v691, %v698
    %v701 = vlaneseq
    %v702 = vshrl.u32 %v701, 7
    %v703 = vsub.s32 1, %v702
    %v704 = vrot.slane %v684, %v703
    %v705 = vmul.f32 %v692, %v704
    %v706 = vmul.f32 %v693, %v704
    %v707 = vadd.f32 %v699, %v705
    %v708 = vadd.f32 %v700, %v706
    %v709 = vlaneseq
    %v710 = vshrl.u32 %v709, 7
    %v711 = vsub.s32 2, %v710
    %v712 = vrot.slane %v684, %v711
    %v713 = vmul.f32 %v691, %v712
    %v714 = vmul.f32 %v694, %v712
    %v715 = vadd.f32 %v707, %v713
    %v716 = vadd.f32 %v708, %v714
    %v717 = vlaneseq
    %v718 = vshrl.u32 %v717, 7
    %v719 = vsub.s32 3, %v718
    %v720 = vrot.slane %v684, %v719
    %v721 = vadd.f32 %v715, %v720
    %v722 = vadd.f32 %v716, %v720
    %v723 = vld [vmem:[%s72 + $0x6] sm:$0xff]
    %724 = vst.msk [vmem:[%s28 + $0x8] sm:$0xff] %vm22, %v723
    %v725 = vld [vmem:[%s28 + $0x18] sm:$0xff]
    %726 = vst.msk [vmem:[%s76 + $0x6] sm:$0xff] %vm22, %v725
    %v727 = vld [vmem:[%s28 + $0x8] sm:$0xff]
    %v728 = vld [vmem:[%s28 + $0x10] sm:$0xff]
    %v729 = vld [vmem:[%s28 + $0xc] sm:$0xff]
    %v730 = vld [vmem:[%s28 + $0x14] sm:$0xff]
    %v731 = vld [vmem:[%s28 + $0x18] sm:$0xff]
    %v732 = vmul.f32 %v727, %v698
    %v733 = vmul.f32 %v728, %v698
    %v734 = vmul.f32 %v729, %v704
    %v735 = vmul.f32 %v730, %v704
    %v736 = vadd.f32 %v732, %v734
    %v737 = vadd.f32 %v733, %v735
    %v738 = vmul.f32 %v728, %v712
    %v739 = vmul.f32 %v731, %v712
    %v740 = vadd.f32 %v736, %v738
    %v741 = vadd.f32 %v737, %v739
    %v742 = vadd.f32 %v740, %v720
    %v743 = vadd.f32 %v741, %v720
    %v744 = vsel %vm22, %v721, 0.0
    %745 = vadd.xlane.f32.xlu0 %v744
    %v746 = vpop.xlane.xlu0 %745
    %v747 = vsel %vm22, %v722, 0.0
    %748 = vadd.xlane.f32.xlu0 %v747
    %v749 = vpop.xlane.xlu0 %748
    %v750 = vsel %vm22, %v742, 0.0
    %751 = vadd.xlane.f32.xlu0 %v750
    %v752 = vpop.xlane.xlu0 %751
    %v753 = vsel %vm22, %v743, 0.0
    %754 = vadd.xlane.f32.xlu0 %v753
    %v755 = vpop.xlane.xlu0 %754
    %v756 = vmul.f32 %v746, 0.03125
    %v757 = vmul.f32 %v749, 0.03125
    %v758 = vmul.f32 %v752, 0.03125
    %v759 = vmul.f32 %v755, 0.03125
    %v760 = vsub.f32 %v721, %v756
    %v761 = vsub.f32 %v722, %v757
    %v762 = vsub.f32 %v742, %v758
    %v763 = vsub.f32 %v743, %v759
    %v764 = vmul.f32 %v760, %v760
    %v765 = vmul.f32 %v761, %v761
    %v766 = vmul.f32 %v762, %v762
    %v767 = vmul.f32 %v763, %v763
    %v768 = vsel %vm22, %v764, 0.0
    %769 = vadd.xlane.f32.xlu0 %v768
    %v770 = vpop.xlane.xlu0 %769
    %v771 = vsel %vm22, %v765, 0.0
    %772 = vadd.xlane.f32.xlu0 %v771
    %v773 = vpop.xlane.xlu0 %772
    %v774 = vsel %vm22, %v766, 0.0
    %775 = vadd.xlane.f32.xlu0 %v774
    %v776 = vpop.xlane.xlu0 %775
    %v777 = vsel %vm22, %v767, 0.0
    %778 = vadd.xlane.f32.xlu0 %v777
    %v779 = vpop.xlane.xlu0 %778
    %v780 = vmul.f32 %v770, 0.03125
    %v781 = vmul.f32 %v773, 0.03125
    %v782 = vmul.f32 %v776, 0.03125
    %v783 = vmul.f32 %v779, 0.03125
    %v784 = vadd.f32 %v780, 1e-05
    %v785 = vadd.f32 %v781, 1e-05
    %v786 = vadd.f32 %v782, 1e-05
    %v787 = vadd.f32 %v783, 1e-05
    %v788 = vrsqrt.pop %v784
    %v789 = vrsqrt.pop %v785
    %v790 = vrsqrt.pop %v786
    %v791 = vrsqrt.pop %v787
    %v792 = vmul.f32 %v760, %v788
    %v793 = vmul.f32 %v761, %v789
    %v794 = vmul.f32 %v762, %v790
    %v795 = vmul.f32 %v763, %v791
    %v796 = vlaneseq
    %v797 = vshrl.u32 %v796, 7
    %v798 = vsub.s32 4, %v797
    %v799 = vrot.slane %v684, %v798
    %v800 = vmul.f32 %v792, %v799
    %v801 = vmul.f32 %v793, %v799
    %v802 = vmul.f32 %v794, %v799
    %v803 = vmul.f32 %v795, %v799
    %v804 = vlaneseq
    %v805 = vshrl.u32 %v804, 7
    %v806 = vsub.s32 5, %v805
    %v807 = vrot.slane %v684, %v806
    %v808 = vadd.f32 %v800, %v807
    %v809 = vadd.f32 %v801, %v807
    %v810 = vadd.f32 %v802, %v807
    %v811 = vadd.f32 %v803, %v807
    %v812 = vmax.f32 %v808, 0.0
    %v813 = vmax.f32 %v809, 0.0
    %v814 = vmax.f32 %v810, 0.0
    %v815 = vmax.f32 %v811, 0.0
    %s816 = scalar_lea.vmem %s3, 64
    %v817 = vld [vmem:[%s816] sm:$0xff]
    %v818 = vld [vmem:[%s816 + $0x8] sm:$0xff]
    %v819 = vld [vmem:[%s816 + $0x10] sm:$0xff]
    %v820 = vld [vmem:[%s816 + $0x18] sm:$0xff]
    %v821 = vlaneseq
    %v822 = vshrl.u32 %v821, 7
    %v823 = vsub.s32 6, %v822
    %v824 = vrot.slane %v684, %v823
    %v826 = vsel %vm22, %v812, 0
    %v829 = vsel %vm22, %v813, 0
    %v832 = vsel %vm22, %v814, 0
    %v835 = vsel %vm22, %v815, 0
    %837 = vmatprep.subr.mxu0 0.0
    %838 = vmatpush1.msra.mxu0 %v817
    %839 = vmatprep.subr.mxu0 0.0
    %840 = vmatpush1.msra.mxu0 %v818
    %841 = vmatprep.subr.mxu0 0.0
    %842 = vmatpush1.msra.mxu0 %v819
    %843 = vmatprep.subr.mxu0 0.0
    %844 = vmatpush1.msra.mxu0 %v820
    %845 = vmatprep.subr.mxu0 0.0
    %846 = vmatpush1.msra.mxu0 0.0
    %847 = vmatprep.subr.mxu0 0.0
    %848 = vmatpush1.msra.mxu0 0.0
    %849 = vmatprep.subr.mxu0 0.0
    %850 = vmatpush1.msra.mxu0 0.0
    %851 = vmatprep.subr.mxu0 0.0
    %852 = vmatpush1.msra.mxu0 0.0
    %853 = vmatprep.subr.mxu0 0.0
    %854 = vmatpush1.msra.mxu0 0.0
    %855 = vmatprep.subr.mxu0 0.0
    %856 = vmatpush1.msra.mxu0 0.0
    %857 = vmatprep.subr.mxu0 0.0
    %858 = vmatpush1.msra.mxu0 0.0
    %859 = vmatprep.subr.mxu0 0.0
    %860 = vmatpush1.msra.mxu0 0.0
    %861 = vmatprep.subr.mxu0 0.0
    %862 = vmatpush1.msra.mxu0 0.0
    %863 = vmatprep.subr.mxu0 0.0
    %864 = vmatpush1.msra.mxu0 0.0
    %865 = vmatprep.subr.mxu0 0.0
    %866 = vmatpush1.msra.mxu0 0.0
    %867 = vmatprep.subr.mxu0 0.0
    %868 = vmatpush1.msra.mxu0 0.0
    %869 = vmatprep.subr.mxu0 0.0
    %870 = vmatpush1.msra.mxu0 0.0
    %871 = vmatprep.subr.mxu0 0.0
    %872 = vmatpush1.msra.mxu0 0.0
    %873 = vmatprep.subr.mxu0 0.0
    %874 = vmatpush1.msra.mxu0 0.0
    %875 = vmatprep.subr.mxu0 0.0
    %876 = vmatpush1.msra.mxu0 0.0
    %877 = vmatprep.subr.mxu0 0.0
    %878 = vmatpush1.msra.mxu0 0.0
    %879 = vmatprep.subr.mxu0 0.0
    %880 = vmatpush1.msra.mxu0 0.0
    %881 = vmatprep.subr.mxu0 0.0
    %882 = vmatpush1.msra.mxu0 0.0
    %883 = vmatprep.subr.mxu0 0.0
    %884 = vmatpush1.msra.mxu0 0.0
    %885 = vmatprep.subr.mxu0 0.0
    %886 = vmatpush1.msra.mxu0 0.0
    %887 = vmatprep.subr.mxu0 0.0
    %888 = vmatpush1.msra.mxu0 0.0
    %889 = vmatprep.subr.mxu0 0.0
    %890 = vmatpush1.msra.mxu0 0.0
    %891 = vmatprep.subr.mxu0 0.0
    %892 = vmatpush1.msra.mxu0 0.0
    %893 = vmatprep.subr.mxu0 0.0
    %894 = vmatpush1.msra.mxu0 0.0
    %895 = vmatprep.subr.mxu0 0.0
    %896 = vmatpush1.msra.mxu0 0.0
    %897 = vmatprep.subr.mxu0 0.0
    %898 = vmatpush1.msra.mxu0 0.0
    %899 = vmatprep.subr.mxu0 0.0
    %900 = vmatpush1.msra.mxu0 0.0
    %901 = vmatprep.mubr.f32.mxu0 0.0
    %902 = vmatmul.mubr.f32.gmra.mrb[0].mxu0 %v826
    %v903 = vpop.f32.mrb[0].mxu0
    %v904 = vadd.f32 %v824, %v903
    %v905 = vpop.f32.mrb[0].mxu0
    %906 = vmatprep.mubr.f32.mxu0 0.0
    %907 = vmatmul.mubr.f32.gmra.mrb[0].mxu0 %v829
    %v908 = vpop.f32.mrb[0].mxu0
    %v909 = vadd.f32 %v824, %v908
    %v910 = vpop.f32.mrb[0].mxu0
    %911 = vmatprep.mubr.f32.mxu0 0.0
    %912 = vmatmul.mubr.f32.gmra.mrb[0].mxu0 %v832
    %v913 = vpop.f32.mrb[0].mxu0
    %v914 = vadd.f32 %v824, %v913
    %v915 = vpop.f32.mrb[0].mxu0
    %916 = vmatprep.mubr.f32.mxu0 0.0
    %917 = vmatmul.mubr.f32.gmra.mrb[0].mxu0 %v835
    %v918 = vpop.f32.mrb[0].mxu0
    %v919 = vadd.f32 %v824, %v918
    %v920 = vpop.f32.mrb[0].mxu0
    %921 = vdwg.mxu0
    %v922 = vsel %vm22, %v904, 0.0
    %923 = vadd.xlane.f32.xlu0 %v922
    %v924 = vpop.xlane.xlu0 %923
    %v925 = vsel %vm22, %v909, 0.0
    %926 = vadd.xlane.f32.xlu0 %v925
    %v927 = vpop.xlane.xlu0 %926
    %v928 = vsel %vm22, %v914, 0.0
    %929 = vadd.xlane.f32.xlu0 %v928
    %v930 = vpop.xlane.xlu0 %929
    %v931 = vsel %vm22, %v919, 0.0
    %932 = vadd.xlane.f32.xlu0 %v931
    %v933 = vpop.xlane.xlu0 %932
    %v934 = vmul.f32 %v924, 0.03125
    %v935 = vmul.f32 %v927, 0.03125
    %v936 = vmul.f32 %v930, 0.03125
    %v937 = vmul.f32 %v933, 0.03125
    %v938 = vsub.f32 %v904, %v934
    %v939 = vsub.f32 %v909, %v935
    %v940 = vsub.f32 %v914, %v936
    %v941 = vsub.f32 %v919, %v937
    %v942 = vmul.f32 %v938, %v938
    %v943 = vmul.f32 %v939, %v939
    %v944 = vmul.f32 %v940, %v940
    %v945 = vmul.f32 %v941, %v941
    %v946 = vsel %vm22, %v942, 0.0
    %947 = vadd.xlane.f32.xlu0 %v946
    %v948 = vpop.xlane.xlu0 %947
    %v949 = vsel %vm22, %v943, 0.0
    %950 = vadd.xlane.f32.xlu0 %v949
    %v951 = vpop.xlane.xlu0 %950
    %v952 = vsel %vm22, %v944, 0.0
    %953 = vadd.xlane.f32.xlu0 %v952
    %v954 = vpop.xlane.xlu0 %953
    %v955 = vsel %vm22, %v945, 0.0
    %956 = vadd.xlane.f32.xlu0 %v955
    %v957 = vpop.xlane.xlu0 %956
    %v958 = vmul.f32 %v948, 0.03125
    %v959 = vmul.f32 %v951, 0.03125
    %v960 = vmul.f32 %v954, 0.03125
    %v961 = vmul.f32 %v957, 0.03125
    %v962 = vadd.f32 %v958, 1e-05
    %v963 = vadd.f32 %v959, 1e-05
    %v964 = vadd.f32 %v960, 1e-05
    %v965 = vadd.f32 %v961, 1e-05
    %v966 = vrsqrt.pop %v962
    %v967 = vrsqrt.pop %v963
    %v968 = vrsqrt.pop %v964
    %v969 = vrsqrt.pop %v965
    %v970 = vmul.f32 %v938, %v966
    %v971 = vmul.f32 %v939, %v967
    %v972 = vmul.f32 %v940, %v968
    %v973 = vmul.f32 %v941, %v969
    %v974 = vlaneseq
    %v975 = vshrl.u32 %v974, 7
    %v976 = vsub.s32 7, %v975
    %v977 = vrot.slane %v684, %v976
    %v978 = vmul.f32 %v970, %v977
    %v979 = vmul.f32 %v971, %v977
    %v980 = vmul.f32 %v972, %v977
    %v981 = vmul.f32 %v973, %v977
    %v982 = vlaneseq
    %v983 = vshrl.u32 %v982, 7
    %v984 = vsub.s32 0, %v983
    %v985 = vrot.slane %v685, %v984
    %v986 = vadd.f32 %v978, %v985
    %v987 = vadd.f32 %v979, %v985
    %v988 = vadd.f32 %v980, %v985
    %v989 = vadd.f32 %v981, %v985
    %v990 = vmax.f32 %v986, 0.0
    %v991 = vmax.f32 %v987, 0.0
    %v992 = vmax.f32 %v988, 0.0
    %v993 = vmax.f32 %v989, 0.0
    %v994 = vld [vmem:[#allocation2 + $0x10] sm:$0xff]
    %v995 = vld [vmem:[#allocation2 + $0x18] sm:$0xff]
    %v996 = vadd.f32 %v994, %v990
    %v997 = vadd.f32 %v995, %v991
    %998 = vst.msk [vmem:[#allocation2 + $0x10] sm:$0xff] %vm22, %v996
    %999 = vst.msk [vmem:[#allocation2 + $0x18] sm:$0xff] %vm22, %v997
    %v1000 = vld [vmem:[%s28 + $0x10] sm:$0xff]
    %v1001 = vld [vmem:[%s28 + $0x18] sm:$0xff]
    %v1002 = vadd.f32 %v1000, %v992
    %v1003 = vadd.f32 %v1001, %v993
    %1004 = vst.msk [vmem:[%s28 + $0x10] sm:$0xff] %vm22, %v1002
    %1005 = vst.msk [vmem:[%s28 + $0x18] sm:$0xff] %vm22, %v1003
    %s1006 = scalar_lea.vmem %s2, 48
    %v1007 = vld [vmem:[%s1006] sm:$0xff]
    %v1008 = vld [vmem:[%s1006 + $0x8] sm:$0xff]
    %v1009 = vld [vmem:[%s1 + $0xe] sm:$0xff]
    %v1010 = vld [vmem:[%s1 + $0x16] sm:$0xff]
    %1011 = vst.msk [vmem:[#allocation2] sm:$0xff] %vm22, %v1009
    %1012 = vst.msk [vmem:[#allocation2 + $0x8] sm:$0xff] %vm22, %v1010
    %v1013 = vld [vmem:[#allocation2 + $0x10] sm:$0xff]
    %v1014 = vld [vmem:[#allocation2 + $0x18] sm:$0xff]
    %1015 = vst.msk [vmem:[%s5 + $0xe] sm:$0xff] %vm22, %v1013
    %1016 = vst.msk [vmem:[%s5 + $0x16] sm:$0xff] %vm22, %v1014
    %v1017 = vld [vmem:[#allocation2] sm:$0xff]
    %v1018 = vld [vmem:[#allocation2 + $0x8] sm:$0xff]
    %v1019 = vld [vmem:[#allocation2 + $0x10] sm:$0xff]
    %v1020 = vld [vmem:[#allocation2 + $0x18] sm:$0xff]
    %v1021 = vlaneseq
    %v1022 = vshrl.u32 %v1021, 7
    %v1023 = vsub.s32 0, %v1022
    %v1024 = vrot.slane %v1007, %v1023
    %v1025 = vmul.f32 %v1017, %v1024
    %v1026 = vmul.f32 %v1018, %v1024
    %v1027 = vlaneseq
    %v1028 = vshrl.u32 %v1027, 7
    %v1029 = vsub.s32 1, %v1028
    %v1030 = vrot.slane %v1007, %v1029
    %v1031 = vmul.f32 %v1018, %v1030
    %v1032 = vmul.f32 %v1019, %v1030
    %v1033 = vadd.f32 %v1025, %v1031
    %v1034 = vadd.f32 %v1026, %v1032
    %v1035 = vlaneseq
    %v1036 = vshrl.u32 %v1035, 7
    %v1037 = vsub.s32 2, %v1036
    %v1038 = vrot.slane %v1007, %v1037
    %v1039 = vmul.f32 %v1019, %v1038
    %v1040 = vmul.f32 %v1020, %v1038
    %v1041 = vadd.f32 %v1033, %v1039
    %v1042 = vadd.f32 %v1034, %v1040
    %v1043 = vlaneseq
    %v1044 = vshrl.u32 %v1043, 7
    %v1045 = vsub.s32 3, %v1044
    %v1046 = vrot.slane %v1007, %v1045
    %v1047 = vadd.f32 %v1041, %v1046
    %v1048 = vadd.f32 %v1042, %v1046
    %v1049 = vld [vmem:[%s72 + $0xe] sm:$0xff]
    %v1050 = vld [vmem:[%s72 + $0x16] sm:$0xff]
    %1051 = vst.msk [vmem:[%s28] sm:$0xff] %vm22, %v1049
    %1052 = vst.msk [vmem:[%s28 + $0x8] sm:$0xff] %vm22, %v1050
    %v1053 = vld [vmem:[%s28 + $0x10] sm:$0xff]
    %v1054 = vld [vmem:[%s28 + $0x18] sm:$0xff]
    %1055 = vst.msk [vmem:[%s76 + $0xe] sm:$0xff] %vm22, %v1053
    %1056 = vst.msk [vmem:[%s76 + $0x16] sm:$0xff] %vm22, %v1054
    %v1057 = vld [vmem:[%s28] sm:$0xff]
    %v1058 = vld [vmem:[%s28 + $0x8] sm:$0xff]
    %v1059 = vld [vmem:[%s28 + $0x10] sm:$0xff]
    %v1060 = vld [vmem:[%s28 + $0x18] sm:$0xff]
    %v1061 = vmul.f32 %v1057, %v1024
    %v1062 = vmul.f32 %v1058, %v1024
    %v1063 = vmul.f32 %v1058, %v1030
    %v1064 = vmul.f32 %v1059, %v1030
    %v1065 = vadd.f32 %v1061, %v1063
    %v1066 = vadd.f32 %v1062, %v1064
    %v1067 = vmul.f32 %v1059, %v1038
    %v1068 = vmul.f32 %v1060, %v1038
    %v1069 = vadd.f32 %v1065, %v1067
    %v1070 = vadd.f32 %v1066, %v1068
    %v1071 = vadd.f32 %v1069, %v1046
    %v1072 = vadd.f32 %v1070, %v1046
    %v1073 = vsel %vm22, %v1047, 0.0
    %1074 = vadd.xlane.f32.xlu0 %v1073
    %v1075 = vpop.xlane.xlu0 %1074
    %v1076 = vsel %vm22, %v1048, 0.0
    %1077 = vadd.xlane.f32.xlu0 %v1076
    %v1078 = vpop.xlane.xlu0 %1077
    %v1079 = vsel %vm22, %v1071, 0.0
    %1080 = vadd.xlane.f32.xlu0 %v1079
    %v1081 = vpop.xlane.xlu0 %1080
    %v1082 = vsel %vm22, %v1072, 0.0
    %1083 = vadd.xlane.f32.xlu0 %v1082
    %v1084 = vpop.xlane.xlu0 %1083
    %v1085 = vmul.f32 %v1075, 0.03125
    %v1086 = vmul.f32 %v1078, 0.03125
    %v1087 = vmul.f32 %v1081, 0.03125
    %v1088 = vmul.f32 %v1084, 0.03125
    %v1089 = vsub.f32 %v1047, %v1085
    %v1090 = vsub.f32 %v1048, %v1086
    %v1091 = vsub.f32 %v1071, %v1087
    %v1092 = vsub.f32 %v1072, %v1088
    %v1093 = vmul.f32 %v1089, %v1089
    %v1094 = vmul.f32 %v1090, %v1090
    %v1095 = vmul.f32 %v1091, %v1091
    %v1096 = vmul.f32 %v1092, %v1092
    %v1097 = vsel %vm22, %v1093, 0.0
    %1098 = vadd.xlane.f32.xlu0 %v1097
    %v1099 = vpop.xlane.xlu0 %1098
    %v1100 = vsel %vm22, %v1094, 0.0
    %1101 = vadd.xlane.f32.xlu0 %v1100
    %v1102 = vpop.xlane.xlu0 %1101
    %v1103 = vsel %vm22, %v1095, 0.0
    %1104 = vadd.xlane.f32.xlu0 %v1103
    %v1105 = vpop.xlane.xlu0 %1104
    %v1106 = vsel %vm22, %v1096, 0.0
    %1107 = vadd.xlane.f32.xlu0 %v1106
    %v1108 = vpop.xlane.xlu0 %1107
    %v1109 = vmul.f32 %v1099, 0.03125
    %v1110 = vmul.f32 %v1102, 0.03125
    %v1111 = vmul.f32 %v1105, 0.03125
    %v1112 = vmul.f32 %v1108, 0.03125
    %v1113 = vadd.f32 %v1109, 1e-05
    %v1114 = vadd.f32 %v1110, 1e-05
    %v1115 = vadd.f32 %v1111, 1e-05
    %v1116 = vadd.f32 %v1112, 1e-05
    %v1117 = vrsqrt.pop %v1113
    %v1118 = vrsqrt.pop %v1114
    %v1119 = vrsqrt.pop %v1115
    %v1120 = vrsqrt.pop %v1116
    %v1121 = vmul.f32 %v1089, %v1117
    %v1122 = vmul.f32 %v1090, %v1118
    %v1123 = vmul.f32 %v1091, %v1119
    %v1124 = vmul.f32 %v1092, %v1120
    %v1125 = vlaneseq
    %v1126 = vshrl.u32 %v1125, 7
    %v1127 = vsub.s32 4, %v1126
    %v1128 = vrot.slane %v1007, %v1127
    %v1129 = vmul.f32 %v1121, %v1128
    %v1130 = vmul.f32 %v1122, %v1128
    %v1131 = vmul.f32 %v1123, %v1128
    %v1132 = vmul.f32 %v1124, %v1128
    %v1133 = vlaneseq
    %v1134 = vshrl.u32 %v1133, 7
    %v1135 = vsub.s32 5, %v1134
    %v1136 = vrot.slane %v1007, %v1135
    %v1137 = vadd.f32 %v1129, %v1136
    %v1138 = vadd.f32 %v1130, %v1136
    %v1139 = vadd.f32 %v1131, %v1136
    %v1140 = vadd.f32 %v1132, %v1136
    %v1141 = vmax.f32 %v1137, 0.0
    %v1142 = vmax.f32 %v1138, 0.0
    %v1143 = vmax.f32 %v1139, 0.0
    %v1144 = vmax.f32 %v1140, 0.0
    %s1145 = scalar_lea.vmem %s3, 96
    %v1146 = vld [vmem:[%s1145] sm:$0xff]
    %v1147 = vld [vmem:[%s1145 + $0x8] sm:$0xff]
    %v1148 = vld [vmem:[%s1145 + $0x10] sm:$0xff]
    %v1149 = vld [vmem:[%s1145 + $0x18] sm:$0xff]
    %v1150 = vlaneseq
    %v1151 = vshrl.u32 %v1150, 7
    %v1152 = vsub.s32 6, %v1151
    %v1153 = vrot.slane %v1007, %v1152
    %v1155 = vsel %vm22, %v1141, 0
    %v1158 = vsel %vm22, %v1142, 0
    %v1161 = vsel %vm22, %v1143, 0
    %v1164 = vsel %vm22, %v1144, 0
    %1166 = vmatprep.subr.mxu0 0.0
    %1167 = vmatpush1.msra.mxu0 %v1146
    %1168 = vmatprep.subr.mxu0 0.0
    %1169 = vmatpush1.msra.mxu0 %v1147
    %1170 = vmatprep.subr.mxu0 0.0
    %1171 = vmatpush1.msra.mxu0 %v1148
    %1172 = vmatprep.subr.mxu0 0.0
    %1173 = vmatpush1.msra.mxu0 %v1149
    %1174 = vmatprep.subr.mxu0 0.0
    %1175 = vmatpush1.msra.mxu0 0.0
    %1176 = vmatprep.subr.mxu0 0.0
    %1177 = vmatpush1.msra.mxu0 0.0
    %1178 = vmatprep.subr.mxu0 0.0
    %1179 = vmatpush1.msra.mxu0 0.0
    %1180 = vmatprep.subr.mxu0 0.0
    %1181 = vmatpush1.msra.mxu0 0.0
    %1182 = vmatprep.subr.mxu0 0.0
    %1183 = vmatpush1.msra.mxu0 0.0
    %1184 = vmatprep.subr.mxu0 0.0
    %1185 = vmatpush1.msra.mxu0 0.0
    %1186 = vmatprep.subr.mxu0 0.0
    %1187 = vmatpush1.msra.mxu0 0.0
    %1188 = vmatprep.subr.mxu0 0.0
    %1189 = vmatpush1.msra.mxu0 0.0
    %1190 = vmatprep.subr.mxu0 0.0
    %1191 = vmatpush1.msra.mxu0 0.0
    %1192 = vmatprep.subr.mxu0 0.0
    %1193 = vmatpush1.msra.mxu0 0.0
    %1194 = vmatprep.subr.mxu0 0.0
    %1195 = vmatpush1.msra.mxu0 0.0
    %1196 = vmatprep.subr.mxu0 0.0
    %1197 = vmatpush1.msra.mxu0 0.0
    %1198 = vmatprep.subr.mxu0 0.0
    %1199 = vmatpush1.msra.mxu0 0.0
    %1200 = vmatprep.subr.mxu0 0.0
    %1201 = vmatpush1.msra.mxu0 0.0
    %1202 = vmatprep.subr.mxu0 0.0
    %1203 = vmatpush1.msra.mxu0 0.0
    %1204 = vmatprep.subr.mxu0 0.0
    %1205 = vmatpush1.msra.mxu0 0.0
    %1206 = vmatprep.subr.mxu0 0.0
    %1207 = vmatpush1.msra.mxu0 0.0
    %1208 = vmatprep.subr.mxu0 0.0
    %1209 = vmatpush1.msra.mxu0 0.0
    %1210 = vmatprep.subr.mxu0 0.0
    %1211 = vmatpush1.msra.mxu0 0.0
    %1212 = vmatprep.subr.mxu0 0.0
    %1213 = vmatpush1.msra.mxu0 0.0
    %1214 = vmatprep.subr.mxu0 0.0
    %1215 = vmatpush1.msra.mxu0 0.0
    %1216 = vmatprep.subr.mxu0 0.0
    %1217 = vmatpush1.msra.mxu0 0.0
    %1218 = vmatprep.subr.mxu0 0.0
    %1219 = vmatpush1.msra.mxu0 0.0
    %1220 = vmatprep.subr.mxu0 0.0
    %1221 = vmatpush1.msra.mxu0 0.0
    %1222 = vmatprep.subr.mxu0 0.0
    %1223 = vmatpush1.msra.mxu0 0.0
    %1224 = vmatprep.subr.mxu0 0.0
    %1225 = vmatpush1.msra.mxu0 0.0
    %1226 = vmatprep.subr.mxu0 0.0
    %1227 = vmatpush1.msra.mxu0 0.0
    %1228 = vmatprep.subr.mxu0 0.0
    %1229 = vmatpush1.msra.mxu0 0.0
    %1230 = vmatprep.mubr.f32.mxu0 0.0
    %1231 = vmatmul.mubr.f32.gmra.mrb[0].mxu0 %v1155
    %v1232 = vpop.f32.mrb[0].mxu0
    %v1233 = vadd.f32 %v1153, %v1232
    %v1234 = vpop.f32.mrb[0].mxu0
    %1235 = vmatprep.mubr.f32.mxu0 0.0
    %1236 = vmatmul.mubr.f32.gmra.mrb[0].mxu0 %v1158
    %v1237 = vpop.f32.mrb[0].mxu0
    %v1238 = vadd.f32 %v1153, %v1237
    %v1239 = vpop.f32.mrb[0].mxu0
    %1240 = vmatprep.mubr.f32.mxu0 0.0
    %1241 = vmatmul.mubr.f32.gmra.mrb[0].mxu0 %v1161
    %v1242 = vpop.f32.mrb[0].mxu0
    %v1243 = vadd.f32 %v1153, %v1242
    %v1244 = vpop.f32.mrb[0].mxu0
    %1245 = vmatprep.mubr.f32.mxu0 0.0
    %1246 = vmatmul.mubr.f32.gmra.mrb[0].mxu0 %v1164
    %v1247 = vpop.f32.mrb[0].mxu0
    %v1248 = vadd.f32 %v1153, %v1247
    %v1249 = vpop.f32.mrb[0].mxu0
    %1250 = vdwg.mxu0
    %v1251 = vsel %vm22, %v1233, 0.0
    %1252 = vadd.xlane.f32.xlu0 %v1251
    %v1253 = vpop.xlane.xlu0 %1252
    %v1254 = vsel %vm22, %v1238, 0.0
    %1255 = vadd.xlane.f32.xlu0 %v1254
    %v1256 = vpop.xlane.xlu0 %1255
    %v1257 = vsel %vm22, %v1243, 0.0
    %1258 = vadd.xlane.f32.xlu0 %v1257
    %v1259 = vpop.xlane.xlu0 %1258
    %v1260 = vsel %vm22, %v1248, 0.0
    %1261 = vadd.xlane.f32.xlu0 %v1260
    %v1262 = vpop.xlane.xlu0 %1261
    %v1263 = vmul.f32 %v1253, 0.03125
    %v1264 = vmul.f32 %v1256, 0.03125
    %v1265 = vmul.f32 %v1259, 0.03125
    %v1266 = vmul.f32 %v1262, 0.03125
    %v1267 = vsub.f32 %v1233, %v1263
    %v1268 = vsub.f32 %v1238, %v1264
    %v1269 = vsub.f32 %v1243, %v1265
    %v1270 = vsub.f32 %v1248, %v1266
    %v1271 = vmul.f32 %v1267, %v1267
    %v1272 = vmul.f32 %v1268, %v1268
    %v1273 = vmul.f32 %v1269, %v1269
    %v1274 = vmul.f32 %v1270, %v1270
    %v1275 = vsel %vm22, %v1271, 0.0
    %1276 = vadd.xlane.f32.xlu0 %v1275
    %v1277 = vpop.xlane.xlu0 %1276
    %v1278 = vsel %vm22, %v1272, 0.0
    %1279 = vadd.xlane.f32.xlu0 %v1278
    %v1280 = vpop.xlane.xlu0 %1279
    %v1281 = vsel %vm22, %v1273, 0.0
    %1282 = vadd.xlane.f32.xlu0 %v1281
    %v1283 = vpop.xlane.xlu0 %1282
    %v1284 = vsel %vm22, %v1274, 0.0
    %1285 = vadd.xlane.f32.xlu0 %v1284
    %v1286 = vpop.xlane.xlu0 %1285
    %v1287 = vmul.f32 %v1277, 0.03125
    %v1288 = vmul.f32 %v1280, 0.03125
    %v1289 = vmul.f32 %v1283, 0.03125
    %v1290 = vmul.f32 %v1286, 0.03125
    %v1291 = vadd.f32 %v1287, 1e-05
    %v1292 = vadd.f32 %v1288, 1e-05
    %v1293 = vadd.f32 %v1289, 1e-05
    %v1294 = vadd.f32 %v1290, 1e-05
    %v1295 = vrsqrt.pop %v1291
    %v1296 = vrsqrt.pop %v1292
    %v1297 = vrsqrt.pop %v1293
    %v1298 = vrsqrt.pop %v1294
    %v1299 = vmul.f32 %v1267, %v1295
    %v1300 = vmul.f32 %v1268, %v1296
    %v1301 = vmul.f32 %v1269, %v1297
    %v1302 = vmul.f32 %v1270, %v1298
    %v1303 = vlaneseq
    %v1304 = vshrl.u32 %v1303, 7
    %v1305 = vsub.s32 7, %v1304
    %v1306 = vrot.slane %v1007, %v1305
    %v1307 = vmul.f32 %v1299, %v1306
    %v1308 = vmul.f32 %v1300, %v1306
    %v1309 = vmul.f32 %v1301, %v1306
    %v1310 = vmul.f32 %v1302, %v1306
    %v1311 = vlaneseq
    %v1312 = vshrl.u32 %v1311, 7
    %v1313 = vsub.s32 0, %v1312
    %v1314 = vrot.slane %v1008, %v1313
    %v1315 = vadd.f32 %v1307, %v1314
    %v1316 = vadd.f32 %v1308, %v1314
    %v1317 = vadd.f32 %v1309, %v1314
    %v1318 = vadd.f32 %v1310, %v1314
    %v1319 = vmax.f32 %v1315, 0.0
    %v1320 = vmax.f32 %v1316, 0.0
    %v1321 = vmax.f32 %v1317, 0.0
    %v1322 = vmax.f32 %v1318, 0.0
    %v1323 = vld [vmem:[#allocation2 + $0x10] sm:$0xff]
    %v1324 = vld [vmem:[#allocation2 + $0x18] sm:$0xff]
    %v1325 = vadd.f32 %v1323, %v1319
    %v1326 = vadd.f32 %v1324, %v1320
    %1327 = vst.msk [vmem:[#allocation2 + $0x10] sm:$0xff] %vm22, %v1325
    %1328 = vst.msk [vmem:[#allocation2 + $0x18] sm:$0xff] %vm22, %v1326
    %v1329 = vld [vmem:[%s28 + $0x10] sm:$0xff]
    %v1330 = vld [vmem:[%s28 + $0x18] sm:$0xff]
    %v1331 = vadd.f32 %v1329, %v1321
    %v1332 = vadd.f32 %v1330, %v1322
    %1333 = vst.msk [vmem:[%s28 + $0x10] sm:$0xff] %vm22, %v1331
    %1334 = vst.msk [vmem:[%s28 + $0x18] sm:$0xff] %vm22, %v1332
    %v1335 = vld [vmem:[#allocation2 + $0x10] sm:$0xff]
    %v1336 = vld [vmem:[#allocation2 + $0x18] sm:$0xff]
    %1337 = vst.msk [vmem:[#allocation3] sm:$0xff] %vm22, %v1335
    %1338 = vst.msk [vmem:[#allocation3 + $0x8] sm:$0xff] %vm22, %v1336
    %v1339 = vld [vmem:[%s28 + $0x10] sm:$0xff]
    %v1340 = vld [vmem:[%s28 + $0x18] sm:$0xff]
    %s1341 = scalar_lea.vmem [#allocation3], 16
    %1342 = vst.msk [vmem:[%s1341] sm:$0xff] %vm22, %v1339
    %1343 = vst.msk [vmem:[%s1341 + $0x8] sm:$0xff] %vm22, %v1340
    // Predicated region
    $region18: #{dilated_causal_conv_encoder.1} parent=1 // pred_check
      _
    $region19: #{dilated_causal_conv_encoder.1} parent=1 // pred_check_branch
      %1345 = sbr.rel (0) target = $region21
    $region20: #{dilated_causal_conv_encoder.1} parent=1 // pred_region
      %s1347 = ssub.s32 512, 512
      %1348 = vsyncadd [#allocation4], %s1347
      %s1349 = sshll.u32 [#allocation3], 4
      %s1350 = int_to_ptr.vmem [resolvable:$true] %s1349
      %1355 = dma.vmem_to_hbm [thread:$0]  %s1350, 512, %s4, [#allocation4], 128, 128, 8
    $region21: #{dilated_causal_conv_encoder.1} parent=1 // pred_fallthru
      _
    // Predicated region
    $region22: #{dilated_causal_conv_encoder.1} parent=1 // pred_check
      _
    $region23: #{dilated_causal_conv_encoder.1} parent=1 // pred_check_branch
      %1357 = sbr.rel (0) target = $region25
    $region24: #{dilated_causal_conv_encoder.1} parent=1 // pred_region
      _
    $region25: #{dilated_causal_conv_encoder.1} parent=1 // pred_fallthru
      _
    // Predicated region
    $region26: #{dilated_causal_conv_encoder.1} parent=1 // pred_check
      _
    $region27: #{dilated_causal_conv_encoder.1} parent=1 // pred_check_branch
      %1359 = sbr.rel (0) target = $region29
    $region28: #{dilated_causal_conv_encoder.1} parent=1 // pred_region
      %1360 = dma.done [#allocation4], 512
    $region29: #{dilated_causal_conv_encoder.1} parent=1 // pred_fallthru
      _
    // Predicated region
    $region30: #{dilated_causal_conv_encoder.1} parent=1 // pred_check
      _
    $region31: #{dilated_causal_conv_encoder.1} parent=1 // pred_check_branch
      %1362 = sbr.rel (0) target = $region33
    $region32: #{dilated_causal_conv_encoder.1} parent=1 // pred_region
      _
    $region33: #{dilated_causal_conv_encoder.1} parent=1 // pred_fallthru
      _
    %1363 = vsyncpa [#allocation4], 1

</llo_original>
